<compile_context>
chip_gen: v7x
topology: tpu7x:2x2x1
jax: 0.10.0
libtpu: 0.0.40
codegen_flags: <defaults>
</compile_context>

<pallas_src>
import functools

import jax
import jax.numpy as jnp
from jax.experimental import pallas as pl
from jax.experimental.pallas import tpu as pltpu


def _round_up(x, m):
    return (x + m - 1) // m * m


def _conv_out(s, k, st):
    return (s - k) // st + 1


# ----------------------------------------------------------------------------
# Pallas kernel: fused (x @ w) + b with optional ReLU   (bf16 in, f32 acc)
# ----------------------------------------------------------------------------
def _mm_bias_act_kernel(x_ref, w_ref, b_ref, o_ref, *, apply_relu):
    acc = jnp.dot(x_ref[...], w_ref[...], preferred_element_type=jnp.float32)
    acc = acc + b_ref[...]          # (1, N) f32, broadcasts over rows
    if apply_relu:
        acc = jnp.maximum(acc, 0.0)
    o_ref[...] = acc.astype(o_ref.dtype)


def matmul_bias_act(x, w, b_row, apply_relu, out_dtype, tm=256):
    """x: (M, K) bf16, w: (K, Np) bf16 (Np % 128 == 0), b_row: (1, Np) f32.

    Returns (M, Np) of out_dtype.  Tiled over M with a 1-D 'parallel' grid.
    """
    M, K = x.shape
    K2, Np = w.shape
    assert K == K2, (K, K2)
    assert Np % 128 == 0, Np

    tm = min(tm, _round_up(M, 16))          # bf16 sublane tiling is 16
    Mp = _round_up(M, tm)
    if Mp != M:
        x = jnp.pad(x, ((0, Mp - M), (0, 0)))
    grid = (Mp // tm,)

    kernel = functools.partial(_mm_bias_act_kernel, apply_relu=apply_relu)
    flops = 2 * Mp * K * Np
    bytes_accessed = (Mp * K + K * Np) * 2 + Np * 4 \
        + Mp * Np * jnp.dtype(out_dtype).itemsize

    out = pl.pallas_call(
        kernel,
        out_shape=jax.ShapeDtypeStruct((Mp, Np), out_dtype),
        grid=grid,
        in_specs=[
            pl.BlockSpec((tm, K), lambda i: (i, 0)),
            pl.BlockSpec((K, Np), lambda i: (0, 0)),
            pl.BlockSpec((1, Np), lambda i: (0, 0)),
        ],
        out_specs=pl.BlockSpec((tm, Np), lambda i: (i, 0)),
        compiler_params=pltpu.CompilerParams(
            dimension_semantics=("parallel",)),
        cost_estimate=pl.CostEstimate(
            flops=int(flops), transcendentals=0,
            bytes_accessed=int(bytes_accessed)),
    )(x, w, b_row)

    return out[:M] if Mp != M else out


# ----------------------------------------------------------------------------
# Pallas kernel: fused MLP tail   out = (relu(x @ w1 + b1)) @ w2 + b2
# ----------------------------------------------------------------------------
def _mlp_kernel(x_ref, w1_ref, b1_ref, w2_ref, b2_ref, o_ref):
    h = jnp.dot(x_ref[...], w1_ref[...], preferred_element_type=jnp.float32)
    h = jnp.maximum(h + b1_ref[...], 0.0)
    out = jnp.dot(h.astype(w2_ref.dtype), w2_ref[...],
                  preferred_element_type=jnp.float32)
    o_ref[...] = (out + b2_ref[...]).astype(o_ref.dtype)


def mlp_pallas(x, w1, b1_row, w2, b2_row, tm=128):
    """x: (M, K1) bf16, w1: (K1, H) bf16, w2: (H, Np2) bf16; biases (1, .) f32."""
    M, K1 = x.shape
    _, H = w1.shape
    _, Np2 = w2.shape
    assert Np2 % 128 == 0 and H % 128 == 0

    tm = min(tm, _round_up(M, 16))
    Mp = _round_up(M, tm)
    if Mp != M:
        x = jnp.pad(x, ((0, Mp - M), (0, 0)))
    grid = (Mp // tm,)

    flops = 2 * Mp * K1 * H + 2 * Mp * H * Np2
    bytes_accessed = (Mp * K1 + K1 * H + H * Np2) * 2 + (H + Np2) * 4 + Mp * Np2 * 4

    out = pl.pallas_call(
        _mlp_kernel,
        out_shape=jax.ShapeDtypeStruct((Mp, Np2), jnp.float32),
        grid=grid,
        in_specs=[
            pl.BlockSpec((tm, K1), lambda i: (i, 0)),
            pl.BlockSpec((K1, H), lambda i: (0, 0)),
            pl.BlockSpec((1, H), lambda i: (0, 0)),
            pl.BlockSpec((H, Np2), lambda i: (0, 0)),
            pl.BlockSpec((1, Np2), lambda i: (0, 0)),
        ],
        out_specs=pl.BlockSpec((tm, Np2), lambda i: (i, 0)),
        compiler_params=pltpu.CompilerParams(
            dimension_semantics=("parallel",)),
        cost_estimate=pl.CostEstimate(
            flops=int(flops), transcendentals=0,
            bytes_accessed=int(bytes_accessed)),
    )(x, w1, b1_row, w2, b2_row)

    return out[:M] if Mp != M else out


# ----------------------------------------------------------------------------
# Conv2d (VALID, strided) = NHWC im2col glue + Pallas GEMM
# ----------------------------------------------------------------------------
def _im2col_nhwc(x, kh, kw, sh, sw):
    """x: (B, H, W, C) -> (B*OH*OW, KH*KW*C); column order (kh, kw, c)."""
    B, H, W, C = x.shape
    OH = _conv_out(H, kh, sh)
    OW = _conv_out(W, kw, sw)
    patches = []
    for i in range(kh):
        for j in range(kw):
            patches.append(
                x[:, i:i + sh * (OH - 1) + 1:sh, j:j + sw * (OW - 1) + 1:sw, :])
    p = jnp.stack(patches, axis=3)            # (B, OH, OW, KH*KW, C)
    return p.reshape(B * OH * OW, kh * kw * C), OH, OW


def conv2d_pallas(x, w_mat, b_row, oc, kh, kw, stride, apply_relu):
    """x: (B, H, W, C) bf16; w_mat: (KH*KW*C, OCp) bf16; b_row: (1, OCp) f32."""
    B = x.shape[0]
    cols, OH, OW = _im2col_nhwc(x, kh, kw, stride[0], stride[1])
    out = matmul_bias_act(cols, w_mat, b_row, apply_relu,
                          out_dtype=jnp.bfloat16)        # (B*OH*OW, OCp)
    return out[:, :oc].reshape(B, OH, OW, oc)            # stay in NHWC


# ----------------------------------------------------------------------------
# Parameters (PyTorch layout) + one-time prep (NHWC / padded / bf16)
# ----------------------------------------------------------------------------
def init_dqn_params(key, input_dims, n_actions):
    c, h, w = input_dims
    h1, w1 = _conv_out(h, 8, 4), _conv_out(w, 8, 4)
    h2, w2 = _conv_out(h1, 4, 2), _conv_out(w1, 4, 2)
    h3, w3 = _conv_out(h2, 3, 1), _conv_out(w2, 3, 1)
    fc_input_dims = 64 * h3 * w3

    ks = jax.random.split(key, 10)

    def unif(k, shape, fan_in):
        bound = 1.0 / jnp.sqrt(fan_in)
        return jax.random.uniform(k, shape, jnp.float32, -bound, bound)

    params = {
        "conv1_w": unif(ks[0], (32, c, 8, 8), c * 8 * 8),
        "conv1_b": unif(ks[1], (32,), c * 8 * 8),
        "conv2_w": unif(ks[2], (64, 32, 4, 4), 32 * 4 * 4),
        "conv2_b": unif(ks[3], (64,), 32 * 4 * 4),
        "conv3_w": unif(ks[4], (64, 64, 3, 3), 64 * 3 * 3),
        "conv3_b": unif(ks[5], (64,), 64 * 3 * 3),
        # fc weights stored as (in, out): x @ W, rows in PyTorch NCHW-flatten order
        "fc1_w": unif(ks[6], (fc_input_dims, 512), fc_input_dims),
        "fc1_b": unif(ks[7], (512,), fc_input_dims),
        "fc2_w": unif(ks[8], (512, n_actions), 512),
        "fc2_b": unif(ks[9], (n_actions,), 512),
    }
    return params, fc_input_dims


def prepare_params(params, input_dims):
    """Reshape / permute / lane-pad / bf16-cast weights once, outside the hot path."""
    _, h, w = input_dims
    h1, w1 = _conv_out(h, 8, 4), _conv_out(w, 8, 4)
    h2, w2 = _conv_out(h1, 4, 2), _conv_out(w1, 4, 2)
    h3, w3 = _conv_out(h2, 3, 1), _conv_out(w2, 3, 1)

    def conv_prep(wk, bk):
        oc = wk.shape[0]
        ocp = _round_up(oc, 128)
        # OIHW -> (KH, KW, IC, OC) -> (KH*KW*IC, OC): matches im2col (kh,kw,c) cols
        w_mat = jnp.transpose(wk, (2, 3, 1, 0)).reshape(-1, oc)
        w_mat = jnp.pad(w_mat, ((0, 0), (0, ocp - oc))).astype(jnp.bfloat16)
        b_row = jnp.pad(bk, (0, ocp - oc)).reshape(1, ocp).astype(jnp.float32)
        return w_mat, b_row

    c1w, c1b = conv_prep(params["conv1_w"], params["conv1_b"])
    c2w, c2b = conv_prep(params["conv2_w"], params["conv2_b"])
    c3w, c3b = conv_prep(params["conv3_w"], params["conv3_b"])

    # fc1 rows: permute from NCHW-flatten (c,h,w) order to NHWC-flatten (h,w,c)
    fc1_w = params["fc1_w"].reshape(64, h3, w3, 512)
    fc1_w = jnp.transpose(fc1_w, (1, 2, 0, 3)).reshape(-1, 512).astype(jnp.bfloat16)
    fc1_b = params["fc1_b"].reshape(1, 512).astype(jnp.float32)

    n_actions = params["fc2_w"].shape[1]
    nap = _round_up(n_actions, 128)
    fc2_w = jnp.pad(params["fc2_w"],
                    ((0, 0), (0, nap - n_actions))).astype(jnp.bfloat16)
    fc2_b = jnp.pad(params["fc2_b"],
                    (0, nap - n_actions)).reshape(1, nap).astype(jnp.float32)

    return {
        "conv1_w": c1w, "conv1_b": c1b,
        "conv2_w": c2w, "conv2_b": c2b,
        "conv3_w": c3w, "conv3_b": c3b,
        "fc1_w": fc1_w, "fc1_b": fc1_b,
        "fc2_w": fc2_w, "fc2_b": fc2_b,
    }


# ----------------------------------------------------------------------------
# Forward (matches DQNetwork.forward)
# ----------------------------------------------------------------------------
@functools.partial(jax.jit, static_argnames=("n_actions",))
def dqn_forward(prep, state, n_actions):
    """relu(conv1) -> relu(conv2) -> conv3 -> flatten -> relu -> relu(fc1) -> fc2."""
    # NCHW -> NHWC once, bf16 operands for the MXU (f32 accumulation in-kernel).
    x = jnp.transpose(state, (0, 2, 3, 1)).astype(jnp.bfloat16)
    x = conv2d_pallas(x, prep["conv1_w"], prep["conv1_b"], 32, 8, 8, (4, 4), True)
    x = conv2d_pallas(x, prep["conv2_w"], prep["conv2_b"], 64, 4, 4, (2, 2), True)
    # post-flatten ReLU fused into conv3 (flatten(relu(x)) == relu(flatten(x)))
    x = conv2d_pallas(x, prep["conv3_w"], prep["conv3_b"], 64, 3, 3, (1, 1), True)
    B = x.shape[0]
    x = x.reshape(B, -1)     # NHWC flatten; fc1 rows were permuted at prep time
    out = mlp_pallas(x, prep["fc1_w"], prep["fc1_b"],
                     prep["fc2_w"], prep["fc2_b"])       # fused fc1+relu+fc2
    return out[:, :n_actions]


# ----------------------------------------------------------------------------
# Reference (same bf16 operand quantization, f32 accumulation) for correctness
# ----------------------------------------------------------------------------
def dqn_forward_ref(params, state):
    bf16 = jnp.bfloat16

    def conv(x, w, b, stride):
        y = jax.lax.conv_general_dilated(
            x.astype(bf16), w.astype(bf16), stride, "VALID",
            dimension_numbers=("NCHW", "OIHW", "NCHW"),
            preferred_element_type=jnp.float32)
        return y + b.reshape(1, -1, 1, 1)

    x = jax.nn.relu(conv(state, params["conv1_w"], params["conv1_b"], (4, 4)))
    x = jax.nn.relu(conv(x, params["conv2_w"], params["conv2_b"], (2, 2)))
    x = conv(x, params["conv3_w"], params["conv3_b"], (1, 1))
    x = x.reshape(x.shape[0], -1)
    x = jax.nn.relu(x)
    h = jnp.dot(x.astype(bf16), params["fc1_w"].astype(bf16),
                preferred_element_type=jnp.float32) + params["fc1_b"]
    h = jax.nn.relu(h)
    out = jnp.dot(h.astype(bf16), params["fc2_w"].astype(bf16),
                  preferred_element_type=jnp.float32) + params["fc2_b"]
    return out


if __name__ == "__main__":
    # Small forward-compatible shapes: 36x36 -> conv1: 8x8 -> conv2: 3x3 -> conv3: 1x1
    B = 2
    input_dims = (4, 36, 36)
    n_actions = 6

    key = jax.random.PRNGKey(0)
    pkey, xkey = jax.random.split(key)
    params, fc_input_dims = init_dqn_params(pkey, input_dims, n_actions)
    prep = prepare_params(params, input_dims)
    state = jax.random.normal(xkey, (B,) + input_dims, jnp.float32)

    out = jax.block_until_ready(dqn_forward(prep, state, n_actions=n_actions))
    ref = jax.block_until_ready(dqn_forward_ref(params, state))

    assert out.shape == (B, n_actions), out.shape
    assert jnp.allclose(out, ref, rtol=2e-2, atol=2e-2), (out, ref)
    print("KERNEL_OK")
</pallas_src>

<mosaic_0001>
module attributes {stable_mosaic.version = 11 : i64} {
  func.func @_mm_bias_act_kernel(%arg0: i32, %arg1: memref<128x256xbf16, #tpu.memory_space<vmem>>, %arg2: memref<256x128xbf16, #tpu.memory_space<vmem>>, %arg3: memref<1x128xf32, #tpu.memory_space<vmem>>, %arg4: memref<128x128xbf16, #tpu.memory_space<vmem>>) attributes {dimension_semantics = [#tpu.dimension_semantics<parallel>], iteration_bounds = array<i64: 1>, scalar_prefetch = 0 : i64, scratch_operands = 0 : i64, tpu.core_type = #tpu.core_type<tc>, window_params = [{transform_indices = @transform_0, window_bounds = array<i64: 128, 256>}, {pipeline_mode = #tpu.pipeline_mode<synchronous>, transform_indices = @transform_1, window_bounds = array<i64: 256, 128>}, {pipeline_mode = #tpu.pipeline_mode<synchronous>, transform_indices = @transform_2, window_bounds = array<i64: 1, 128>}, {transform_indices = @transform_3, window_bounds = array<i64: 128, 128>}]} {
    %c0 = arith.constant 0 : index
    %c0_0 = arith.constant 0 : index
    %0 = vector.load %arg1[%c0, %c0_0] : memref<128x256xbf16, #tpu.memory_space<vmem>>, vector<128x256xbf16>
    %c0_1 = arith.constant 0 : index
    %c0_2 = arith.constant 0 : index
    %1 = vector.load %arg2[%c0_1, %c0_2] : memref<256x128xbf16, #tpu.memory_space<vmem>>, vector<256x128xbf16>
    %cst = arith.constant dense<0.000000e+00> : vector<128x128xf32>
    %2 = tpu.matmul %0, %1, %cst {dimension_numbers = #tpu.dot_dimension_numbers<[1], [0], [0], [1], [0, 0, 1, 1], [], []>} : vector<128x256xbf16>, vector<256x128xbf16>, vector<128x128xf32> -> vector<128x128xf32>
    %c0_3 = arith.constant 0 : index
    %c0_4 = arith.constant 0 : index
    %3 = vector.load %arg3[%c0_3, %c0_4] : memref<1x128xf32, #tpu.memory_space<vmem>>, vector<1x128xf32>
    %4 = vector.broadcast %3 : vector<1x128xf32> to vector<128x128xf32>
    %5 = arith.addf %2, %4 : vector<128x128xf32>
    %cst_5 = arith.constant 0.000000e+00 : f32
    %6 = vector.broadcast %cst_5 : f32 to vector<128x128xf32>
    %7 = arith.maximumf %5, %6 : vector<128x128xf32>
    %8 = arith.truncf %7 : vector<128x128xf32> to vector<128x128xbf16>
    %c0_6 = arith.constant 0 : index
    %c0_7 = arith.constant 0 : index
    %9 = vector.load %arg4[%c0_6, %c0_7] : memref<128x128xbf16, #tpu.memory_space<vmem>>, vector<128x128xbf16>
    tpu.vector_store %arg4[%c0_6, %c0_7], %8 {strides = array<i32>} : memref<128x128xbf16, #tpu.memory_space<vmem>>, vector<128x128xbf16>,
    return
  }
  func.func @transform_0(%arg0: i32) -> (i32, i32) {
    %c0_i32 = arith.constant 0 : i32
    %c0_i32_0 = arith.constant 0 : i32
    return %arg0, %c0_i32 : i32, i32
  }
  func.func @transform_1(%arg0: i32) -> (i32, i32) {
    %c0_i32 = arith.constant 0 : i32
    %c0_i32_0 = arith.constant 0 : i32
    %c0_i32_1 = arith.constant 0 : i32
    return %c0_i32, %c0_i32_0 : i32, i32
  }
  func.func @transform_2(%arg0: i32) -> (i32, i32) {
    %c0_i32 = arith.constant 0 : i32
    %c0_i32_0 = arith.constant 0 : i32
    %c0_i32_1 = arith.constant 0 : i32
    return %c0_i32, %c0_i32_0 : i32, i32
  }
  func.func @transform_3(%arg0: i32) -> (i32, i32) {
    %c0_i32 = arith.constant 0 : i32
    %c0_i32_0 = arith.constant 0 : i32
    return %arg0, %c0_i32 : i32, i32
  }
}

module attributes {stable_mosaic.version = 11 : i64} {
  func.func @_mm_bias_act_kernel(%arg0: i32, %arg1: memref<32x512xbf16, #tpu.memory_space<vmem>>, %arg2: memref<512x128xbf16, #tpu.memory_space<vmem>>, %arg3: memref<1x128xf32, #tpu.memory_space<vmem>>, %arg4: memref<32x128xbf16, #tpu.memory_space<vmem>>) attributes {dimension_semantics = [#tpu.dimension_semantics<parallel>], iteration_bounds = array<i64: 1>, scalar_prefetch = 0 : i64, scratch_operands = 0 : i64, tpu.core_type = #tpu.core_type<tc>, window_params = [{transform_indices = @transform_0, window_bounds = array<i64: 32, 512>}, {pipeline_mode = #tpu.pipeline_mode<synchronous>, transform_indices = @transform_1, window_bounds = array<i64: 512, 128>}, {pipeline_mode = #tpu.pipeline_mode<synchronous>, transform_indices = @transform_2, window_bounds = array<i64: 1, 128>}, {transform_indices = @transform_3, window_bounds = array<i64: 32, 128>}]} {
    %c0 = arith.constant 0 : index
    %c0_0 = arith.constant 0 : index
    %0 = vector.load %arg1[%c0, %c0_0] : memref<32x512xbf16, #tpu.memory_space<vmem>>, vector<32x512xbf16>
    %c0_1 = arith.constant 0 : index
    %c0_2 = arith.constant 0 : index
    %1 = vector.load %arg2[%c0_1, %c0_2] : memref<512x128xbf16, #tpu.memory_space<vmem>>, vector<512x128xbf16>
    %cst = arith.constant dense<0.000000e+00> : vector<32x128xf32>
    %2 = tpu.matmul %0, %1, %cst {dimension_numbers = #tpu.dot_dimension_numbers<[1], [0], [0], [1], [0, 0, 1, 1], [], []>} : vector<32x512xbf16>, vector<512x128xbf16>, vector<32x128xf32> -> vector<32x128xf32>
    %c0_3 = arith.constant 0 : index
    %c0_4 = arith.constant 0 : index
    %3 = vector.load %arg3[%c0_3, %c0_4] : memref<1x128xf32, #tpu.memory_space<vmem>>, vector<1x128xf32>
    %4 = vector.broadcast %3 : vector<1x128xf32> to vector<32x128xf32>
    %5 = arith.addf %2, %4 : vector<32x128xf32>
    %cst_5 = arith.constant 0.000000e+00 : f32
    %6 = vector.broadcast %cst_5 : f32 to vector<32x128xf32>
    %7 = arith.maximumf %5, %6 : vector<32x128xf32>
    %8 = arith.truncf %7 : vector<32x128xf32> to vector<32x128xbf16>
    %c0_6 = arith.constant 0 : index
    %c0_7 = arith.constant 0 : index
    %9 = vector.load %arg4[%c0_6, %c0_7] : memref<32x128xbf16, #tpu.memory_space<vmem>>, vector<32x128xbf16>
    tpu.vector_store %arg4[%c0_6, %c0_7], %8 {strides = array<i32>} : memref<32x128xbf16, #tpu.memory_space<vmem>>, vector<32x128xbf16>,
    return
  }
  func.func @transform_0(%arg0: i32) -> (i32, i32) {
    %c0_i32 = arith.constant 0 : i32
    %c0_i32_0 = arith.constant 0 : i32
    return %arg0, %c0_i32 : i32, i32
  }
  func.func @transform_1(%arg0: i32) -> (i32, i32) {
    %c0_i32 = arith.constant 0 : i32
    %c0_i32_0 = arith.constant 0 : i32
    %c0_i32_1 = arith.constant 0 : i32
    return %c0_i32, %c0_i32_0 : i32, i32
  }
  func.func @transform_2(%arg0: i32) -> (i32, i32) {
    %c0_i32 = arith.constant 0 : i32
    %c0_i32_0 = arith.constant 0 : i32
    %c0_i32_1 = arith.constant 0 : i32
    return %c0_i32, %c0_i32_0 : i32, i32
  }
  func.func @transform_3(%arg0: i32) -> (i32, i32) {
    %c0_i32 = arith.constant 0 : i32
    %c0_i32_0 = arith.constant 0 : i32
    return %arg0, %c0_i32 : i32, i32
  }
}

module attributes {stable_mosaic.version = 11 : i64} {
  func.func @_mlp_kernel(%arg0: i32, %arg1: memref<16x64xbf16, #tpu.memory_space<vmem>>, %arg2: memref<64x512xbf16, #tpu.memory_space<vmem>>, %arg3: memref<1x512xf32, #tpu.memory_space<vmem>>, %arg4: memref<512x128xbf16, #tpu.memory_space<vmem>>, %arg5: memref<1x128xf32, #tpu.memory_space<vmem>>, %arg6: memref<16x128xf32, #tpu.memory_space<vmem>>) attributes {dimension_semantics = [#tpu.dimension_semantics<parallel>], iteration_bounds = array<i64: 1>, scalar_prefetch = 0 : i64, scratch_operands = 0 : i64, tpu.core_type = #tpu.core_type<tc>, window_params = [{transform_indices = @transform_0, window_bounds = array<i64: 16, 64>}, {pipeline_mode = #tpu.pipeline_mode<synchronous>, transform_indices = @transform_1, window_bounds = array<i64: 64, 512>}, {pipeline_mode = #tpu.pipeline_mode<synchronous>, transform_indices = @transform_2, window_bounds = array<i64: 1, 512>}, {pipeline_mode = #tpu.pipeline_mode<synchronous>, transform_indices = @transform_3, window_bounds = array<i64: 512, 128>}, {pipeline_mode = #tpu.pipeline_mode<synchronous>, transform_indices = @transform_4, window_bounds = array<i64: 1, 128>}, {transform_indices = @transform_5, window_bounds = array<i64: 16, 128>}]} {
    %c0 = arith.constant 0 : index
    %c0_0 = arith.constant 0 : index
    %0 = vector.load %arg1[%c0, %c0_0] : memref<16x64xbf16, #tpu.memory_space<vmem>>, vector<16x64xbf16>
    %c0_1 = arith.constant 0 : index
    %c0_2 = arith.constant 0 : index
    %1 = vector.load %arg2[%c0_1, %c0_2] : memref<64x512xbf16, #tpu.memory_space<vmem>>, vector<64x512xbf16>
    %cst = arith.constant dense<0.000000e+00> : vector<16x512xf32>
    %2 = tpu.matmul %0, %1, %cst {dimension_numbers = #tpu.dot_dimension_numbers<[1], [0], [0], [1], [0, 0, 1, 1], [], []>} : vector<16x64xbf16>, vector<64x512xbf16>, vector<16x512xf32> -> vector<16x512xf32>
    %c0_3 = arith.constant 0 : index
    %c0_4 = arith.constant 0 : index
    %3 = vector.load %arg3[%c0_3, %c0_4] : memref<1x512xf32, #tpu.memory_space<vmem>>, vector<1x512xf32>
    %4 = vector.broadcast %3 : vector<1x512xf32> to vector<16x512xf32>
    %5 = arith.addf %2, %4 : vector<16x512xf32>
    %cst_5 = arith.constant 0.000000e+00 : f32
    %6 = vector.broadcast %cst_5 : f32 to vector<16x512xf32>
    %7 = arith.maximumf %5, %6 : vector<16x512xf32>
    %8 = arith.truncf %7 : vector<16x512xf32> to vector<16x512xbf16>
    %c0_6 = arith.constant 0 : index
    %c0_7 = arith.constant 0 : index
    %9 = vector.load %arg4[%c0_6, %c0_7] : memref<512x128xbf16, #tpu.memory_space<vmem>>, vector<512x128xbf16>
    %cst_8 = arith.constant dense<0.000000e+00> : vector<16x128xf32>
    %10 = tpu.matmul %8, %9, %cst_8 {dimension_numbers = #tpu.dot_dimension_numbers<[1], [0], [0], [1], [0, 0, 1, 1], [], []>} : vector<16x512xbf16>, vector<512x128xbf16>, vector<16x128xf32> -> vector<16x128xf32>
    %c0_9 = arith.constant 0 : index
    %c0_10 = arith.constant 0 : index
    %11 = vector.load %arg5[%c0_9, %c0_10] : memref<1x128xf32, #tpu.memory_space<vmem>>, vector<1x128xf32>
    %12 = vector.broadcast %11 : vector<1x128xf32> to vector<16x128xf32>
    %13 = arith.addf %10, %12 : vector<16x128xf32>
    %c0_11 = arith.constant 0 : index
    %c0_12 = arith.constant 0 : index
    %14 = vector.load %arg6[%c0_11, %c0_12] : memref<16x128xf32, #tpu.memory_space<vmem>>, vector<16x128xf32>
    tpu.vector_store %arg6[%c0_11, %c0_12], %13 {strides = array<i32>} : memref<16x128xf32, #tpu.memory_space<vmem>>, vector<16x128xf32>,
    return
  }
  func.func @transform_0(%arg0: i32) -> (i32, i32) {
    %c0_i32 = arith.constant 0 : i32
    %c0_i32_0 = arith.constant 0 : i32
    return %arg0, %c0_i32 : i32, i32
  }
  func.func @transform_1(%arg0: i32) -> (i32, i32) {
    %c0_i32 = arith.constant 0 : i32
    %c0_i32_0 = arith.constant 0 : i32
    %c0_i32_1 = arith.constant 0 : i32
    return %c0_i32, %c0_i32_0 : i32, i32
  }
  func.func @transform_2(%arg0: i32) -> (i32, i32) {
    %c0_i32 = arith.constant 0 : i32
    %c0_i32_0 = arith.constant 0 : i32
    %c0_i32_1 = arith.constant 0 : i32
    return %c0_i32, %c0_i32_0 : i32, i32
  }
  func.func @transform_3(%arg0: i32) -> (i32, i32) {
    %c0_i32 = arith.constant 0 : i32
    %c0_i32_0 = arith.constant 0 : i32
    %c0_i32_1 = arith.constant 0 : i32
    return %c0_i32, %c0_i32_0 : i32, i32
  }
  func.func @transform_4(%arg0: i32) -> (i32, i32) {
    %c0_i32 = arith.constant 0 : i32
    %c0_i32_0 = arith.constant 0 : i32
    %c0_i32_1 = arith.constant 0 : i32
    return %c0_i32, %c0_i32_0 : i32, i32
  }
  func.func @transform_5(%arg0: i32) -> (i32, i32) {
    %c0_i32 = arith.constant 0 : i32
    %c0_i32_0 = arith.constant 0 : i32
    return %arg0, %c0_i32 : i32, i32
  }
}

module attributes {stable_mosaic.version = 11 : i64} {
  func.func @_mm_bias_act_kernel(%arg0: i32, %arg1: memref<16x576xbf16, #tpu.memory_space<vmem>>, %arg2: memref<576x128xbf16, #tpu.memory_space<vmem>>, %arg3: memref<1x128xf32, #tpu.memory_space<vmem>>, %arg4: memref<16x128xbf16, #tpu.memory_space<vmem>>) attributes {dimension_semantics = [#tpu.dimension_semantics<parallel>], iteration_bounds = array<i64: 1>, scalar_prefetch = 0 : i64, scratch_operands = 0 : i64, tpu.core_type = #tpu.core_type<tc>, window_params = [{transform_indices = @transform_0, window_bounds = array<i64: 16, 576>}, {pipeline_mode = #tpu.pipeline_mode<synchronous>, transform_indices = @transform_1, window_bounds = array<i64: 576, 128>}, {pipeline_mode = #tpu.pipeline_mode<synchronous>, transform_indices = @transform_2, window_bounds = array<i64: 1, 128>}, {transform_indices = @transform_3, window_bounds = array<i64: 16, 128>}]} {
    %c0 = arith.constant 0 : index
    %c0_0 = arith.constant 0 : index
    %0 = vector.load %arg1[%c0, %c0_0] : memref<16x576xbf16, #tpu.memory_space<vmem>>, vector<16x576xbf16>
    %c0_1 = arith.constant 0 : index
    %c0_2 = arith.constant 0 : index
    %1 = vector.load %arg2[%c0_1, %c0_2] : memref<576x128xbf16, #tpu.memory_space<vmem>>, vector<576x128xbf16>
    %cst = arith.constant dense<0.000000e+00> : vector<16x128xf32>
    %2 = tpu.matmul %0, %1, %cst {dimension_numbers = #tpu.dot_dimension_numbers<[1], [0], [0], [1], [0, 0, 1, 1], [], []>} : vector<16x576xbf16>, vector<576x128xbf16>, vector<16x128xf32> -> vector<16x128xf32>
    %c0_3 = arith.constant 0 : index
    %c0_4 = arith.constant 0 : index
    %3 = vector.load %arg3[%c0_3, %c0_4] : memref<1x128xf32, #tpu.memory_space<vmem>>, vector<1x128xf32>
    %4 = vector.broadcast %3 : vector<1x128xf32> to vector<16x128xf32>
    %5 = arith.addf %2, %4 : vector<16x128xf32>
    %cst_5 = arith.constant 0.000000e+00 : f32
    %6 = vector.broadcast %cst_5 : f32 to vector<16x128xf32>
    %7 = arith.maximumf %5, %6 : vector<16x128xf32>
    %8 = arith.truncf %7 : vector<16x128xf32> to vector<16x128xbf16>
    %c0_6 = arith.constant 0 : index
    %c0_7 = arith.constant 0 : index
    %9 = vector.load %arg4[%c0_6, %c0_7] : memref<16x128xbf16, #tpu.memory_space<vmem>>, vector<16x128xbf16>
    tpu.vector_store %arg4[%c0_6, %c0_7], %8 {strides = array<i32>} : memref<16x128xbf16, #tpu.memory_space<vmem>>, vector<16x128xbf16>,
    return
  }
  func.func @transform_0(%arg0: i32) -> (i32, i32) {
    %c0_i32 = arith.constant 0 : i32
    %c0_i32_0 = arith.constant 0 : i32
    return %arg0, %c0_i32 : i32, i32
  }
  func.func @transform_1(%arg0: i32) -> (i32, i32) {
    %c0_i32 = arith.constant 0 : i32
    %c0_i32_0 = arith.constant 0 : i32
    %c0_i32_1 = arith.constant 0 : i32
    return %c0_i32, %c0_i32_0 : i32, i32
  }
  func.func @transform_2(%arg0: i32) -> (i32, i32) {
    %c0_i32 = arith.constant 0 : i32
    %c0_i32_0 = arith.constant 0 : i32
    %c0_i32_1 = arith.constant 0 : i32
    return %c0_i32, %c0_i32_0 : i32, i32
  }
  func.func @transform_3(%arg0: i32) -> (i32, i32) {
    %c0_i32 = arith.constant 0 : i32
    %c0_i32_0 = arith.constant 0 : i32
    return %arg0, %c0_i32 : i32, i32
  }
}

</mosaic_0001>

<llo_original>
// kernel: dqn_forward.4
$region0: #{dqn_forward.4}
  #allocation0 [shape = 'u32[]', space=smem, size = 0x4, offset = 0x4, fixed_abs, tag = 'smem constant byte address 0x4 - core index']
  #allocation1 [shape = 'u32[144,128]{1,0:T(1,128)}', space=vmem, size = 0x12000, scoped, tag = 'internal scratch']
  %s0 = inlined_call_operand.vmem [shape: bf16[128,256], index: 0, kind: input, shape index: {}]
  %s1 = inlined_call_operand.vmem [shape: bf16[256,128], index: 1, kind: input, shape index: {}]
  %s2 = inlined_call_operand.vmem [shape: f32[1,128], index: 2, kind: input, shape index: {}]
  %s3 = inlined_call_operand.vmem [shape: bf16[128,128], index: 3, kind: output, shape index: {}]
  %s4 = sld [smem:[#allocation0]]
  $region22: #{dqn_forward.4} parent=0
    _
  %s6 = ssub.s32 1, %s4
  %s7 = scalar_select 0, %s6, %s4
  // Predicated region
  $region2: #{dqn_forward.4} parent=0 // pred_check
    _
  $region3: #{dqn_forward.4} parent=0 // pred_check_branch
    %9 = sbr.rel (0) target = $region5
  $region4: #{dqn_forward.4} parent=0 // pred_region
    _
  $region5: #{dqn_forward.4} parent=0 // pred_fallthru
    _
  // Predicated region
  $region6: #{dqn_forward.4} parent=0 // pred_check
    _
  $region7: #{dqn_forward.4} parent=0 // pred_check_branch
    %11 = sbr.rel (0) target = $region9
  $region8: #{dqn_forward.4} parent=0 // pred_region
    _
  $region9: #{dqn_forward.4} parent=0 // pred_fallthru
    _
  // Predicated region
  $region10: #{dqn_forward.4} parent=0 // pred_check
    _
  $region11: #{dqn_forward.4} parent=0 // pred_check_branch
    %13 = sbr.rel (0) target = $region13
  $region12: #{dqn_forward.4} parent=0 // pred_region
    _
  $region13: #{dqn_forward.4} parent=0 // pred_fallthru
    _
  %v15 = vld [vmem:[%s0] sm:$0xff]
  %v16 = vld [vmem:[%s0 + $0x8] sm:$0xff]
  %v17 = vld [vmem:[%s0 + $0x10] sm:$0xff]
  %v18 = vld [vmem:[%s0 + $0x18] sm:$0xff]
  %v19 = vld [vmem:[%s0 + $0x20] sm:$0xff]
  %v20 = vld [vmem:[%s0 + $0x28] sm:$0xff]
  %v21 = vld [vmem:[%s0 + $0x30] sm:$0xff]
  %v22 = vld [vmem:[%s0 + $0x38] sm:$0xff]
  %v23 = vld [vmem:[%s0 + $0x40] sm:$0xff]
  %v24 = vld [vmem:[%s0 + $0x48] sm:$0xff]
  %v25 = vld [vmem:[%s0 + $0x50] sm:$0xff]
  %v26 = vld [vmem:[%s0 + $0x58] sm:$0xff]
  %v27 = vld [vmem:[%s0 + $0x60] sm:$0xff]
  %v28 = vld [vmem:[%s0 + $0x68] sm:$0xff]
  %v29 = vld [vmem:[%s0 + $0x70] sm:$0xff]
  %v30 = vld [vmem:[%s0 + $0x78] sm:$0xff]
  %v31 = vld [vmem:[%s1] sm:$0xf]
  %v32 = vld [vmem:[%s1 + $0x4] sm:$0xf]
  %v33 = vld [vmem:[%s1 + $0x8] sm:$0xf]
  %v34 = vld [vmem:[%s1 + $0xc] sm:$0xf]
  %v35 = vld [vmem:[%s1 + $0x10] sm:$0xf]
  %v36 = vld [vmem:[%s1 + $0x14] sm:$0xf]
  %v37 = vld [vmem:[%s1 + $0x18] sm:$0xf]
  %v38 = vld [vmem:[%s1 + $0x1c] sm:$0xf]
  %v39 = vld [vmem:[%s1 + $0x20] sm:$0xf]
  %v40 = vld [vmem:[%s1 + $0x24] sm:$0xf]
  %v41 = vld [vmem:[%s1 + $0x28] sm:$0xf]
  %v42 = vld [vmem:[%s1 + $0x2c] sm:$0xf]
  %v43 = vld [vmem:[%s1 + $0x30] sm:$0xf]
  %v44 = vld [vmem:[%s1 + $0x34] sm:$0xf]
  %v45 = vld [vmem:[%s1 + $0x38] sm:$0xf]
  %v46 = vld [vmem:[%s1 + $0x3c] sm:$0xf]
  %v47 = vld [vmem:[%s1 + $0x40] sm:$0xf]
  %v48 = vld [vmem:[%s1 + $0x44] sm:$0xf]
  %v49 = vld [vmem:[%s1 + $0x48] sm:$0xf]
  %v50 = vld [vmem:[%s1 + $0x4c] sm:$0xf]
  %v51 = vld [vmem:[%s1 + $0x50] sm:$0xf]
  %v52 = vld [vmem:[%s1 + $0x54] sm:$0xf]
  %v53 = vld [vmem:[%s1 + $0x58] sm:$0xf]
  %v54 = vld [vmem:[%s1 + $0x5c] sm:$0xf]
  %v55 = vld [vmem:[%s1 + $0x60] sm:$0xf]
  %v56 = vld [vmem:[%s1 + $0x64] sm:$0xf]
  %v57 = vld [vmem:[%s1 + $0x68] sm:$0xf]
  %v58 = vld [vmem:[%s1 + $0x6c] sm:$0xf]
  %v59 = vld [vmem:[%s1 + $0x70] sm:$0xf]
  %v60 = vld [vmem:[%s1 + $0x74] sm:$0xf]
  %v61 = vld [vmem:[%s1 + $0x78] sm:$0xf]
  %v62 = vld [vmem:[%s1 + $0x7c] sm:$0xf]
  %v63 = vld [vmem:[%s2] sm:$0x1]
  %v65 = vlaneseq
  %v66 = vshrl.u32 %v65, 7
  %v67 = vsub.s32 0, %v66
  %v68 = vrot.slane %v63, %v67
  %v86 = vunpack.c.l.b16 %v15
  %v87 = vunpack.c.h.b16 %v15
  %v88 = vunpack.c.l.b16 %v16
  %v89 = vunpack.c.h.b16 %v16
  %v90 = vunpack.c.l.b16 %v17
  %v91 = vunpack.c.h.b16 %v17
  %v92 = vunpack.c.l.b16 %v18
  %v93 = vunpack.c.h.b16 %v18
  %v94 = vunpack.c.l.b16 %v19
  %v95 = vunpack.c.h.b16 %v19
  %v96 = vunpack.c.l.b16 %v20
  %v97 = vunpack.c.h.b16 %v20
  %v98 = vunpack.c.l.b16 %v21
  %v99 = vunpack.c.h.b16 %v21
  %v100 = vunpack.c.l.b16 %v22
  %v101 = vunpack.c.h.b16 %v22
  %v102 = vunpack.c.l.b16 %v23
  %v103 = vunpack.c.h.b16 %v23
  %v104 = vunpack.c.l.b16 %v24
  %v105 = vunpack.c.h.b16 %v24
  %v106 = vunpack.c.l.b16 %v25
  %v107 = vunpack.c.h.b16 %v25
  %v108 = vunpack.c.l.b16 %v26
  %v109 = vunpack.c.h.b16 %v26
  %v110 = vunpack.c.l.b16 %v27
  %v111 = vunpack.c.h.b16 %v27
  %v112 = vunpack.c.l.b16 %v28
  %v113 = vunpack.c.h.b16 %v28
  %v114 = vunpack.c.l.b16 %v29
  %v115 = vunpack.c.h.b16 %v29
  %v116 = vunpack.c.l.b16 %v30
  %v117 = vunpack.c.h.b16 %v30
  %v118 = vpack.c.b16 %v88, %v86
  %v119 = vpack.c.b16 %v89, %v87
  %v120 = vpack.c.b16 %v92, %v90
  %v121 = vpack.c.b16 %v93, %v91
  %v122 = vpack.c.b16 %v96, %v94
  %v123 = vpack.c.b16 %v97, %v95
  %v124 = vpack.c.b16 %v100, %v98
  %v125 = vpack.c.b16 %v101, %v99
  %v126 = vpack.c.b16 %v104, %v102
  %v127 = vpack.c.b16 %v105, %v103
  %v128 = vpack.c.b16 %v108, %v106
  %v129 = vpack.c.b16 %v109, %v107
  %v130 = vpack.c.b16 %v112, %v110
  %v131 = vpack.c.b16 %v113, %v111
  %v132 = vpack.c.b16 %v116, %v114
  %v133 = vpack.c.b16 %v117, %v115
  %v182 = vunpack.c.l.b16 %v31
  %v183 = vunpack.c.l.b16 %v32
  %v184 = vunpack.c.l.b16 %v33
  %v185 = vunpack.c.l.b16 %v34
  %v186 = vunpack.c.l.b16 %v35
  %v187 = vunpack.c.l.b16 %v36
  %v188 = vunpack.c.l.b16 %v37
  %v189 = vunpack.c.l.b16 %v38
  %v190 = vunpack.c.l.b16 %v39
  %v191 = vunpack.c.l.b16 %v40
  %v192 = vunpack.c.l.b16 %v41
  %v193 = vunpack.c.l.b16 %v42
  %v194 = vunpack.c.l.b16 %v43
  %v195 = vunpack.c.l.b16 %v44
  %v196 = vunpack.c.l.b16 %v45
  %v197 = vunpack.c.l.b16 %v46
  %v198 = vunpack.c.l.b16 %v47
  %v199 = vunpack.c.l.b16 %v48
  %v200 = vunpack.c.l.b16 %v49
  %v201 = vunpack.c.l.b16 %v50
  %v202 = vunpack.c.l.b16 %v51
  %v203 = vunpack.c.l.b16 %v52
  %v204 = vunpack.c.l.b16 %v53
  %v205 = vunpack.c.l.b16 %v54
  %v206 = vunpack.c.l.b16 %v55
  %v207 = vunpack.c.l.b16 %v56
  %v208 = vunpack.c.l.b16 %v57
  %v209 = vunpack.c.l.b16 %v58
  %v210 = vunpack.c.l.b16 %v59
  %v211 = vunpack.c.l.b16 %v60
  %v212 = vunpack.c.l.b16 %v61
  %v213 = vunpack.c.l.b16 %v62
  %v214 = vpack.c.b16 %v183, %v182
  %v215 = vpack.c.b16 %v185, %v184
  %v216 = vpack.c.b16 %v187, %v186
  %v217 = vpack.c.b16 %v189, %v188
  %v218 = vpack.c.b16 %v191, %v190
  %v219 = vpack.c.b16 %v193, %v192
  %v220 = vpack.c.b16 %v195, %v194
  %v221 = vpack.c.b16 %v197, %v196
  %v222 = vpack.c.b16 %v199, %v198
  %v223 = vpack.c.b16 %v201, %v200
  %v224 = vpack.c.b16 %v203, %v202
  %v225 = vpack.c.b16 %v205, %v204
  %v226 = vpack.c.b16 %v207, %v206
  %v227 = vpack.c.b16 %v209, %v208
  %v228 = vpack.c.b16 %v211, %v210
  %v229 = vpack.c.b16 %v213, %v212
  %246 = vmatprep.subr.bf16.mxu0 0
  %247 = vmatpush1.bf16.msra.mxu0 %v214
  %248 = vmatprep.subr.bf16.mxu0 0
  %249 = vmatpush1.bf16.msra.mxu0 %v215
  %250 = vmatprep.subr.bf16.mxu0 0
  %251 = vmatpush1.bf16.msra.mxu0 %v216
  %252 = vmatprep.subr.bf16.mxu0 0
  %253 = vmatpush1.bf16.msra.mxu0 %v217
  %254 = vmatprep.subr.bf16.mxu0 0
  %255 = vmatpush1.bf16.msra.mxu0 %v218
  %256 = vmatprep.subr.bf16.mxu0 0
  %257 = vmatpush1.bf16.msra.mxu0 %v219
  %258 = vmatprep.subr.bf16.mxu0 0
  %259 = vmatpush1.bf16.msra.mxu0 %v220
  %260 = vmatprep.subr.bf16.mxu0 0
  %261 = vmatpush1.bf16.msra.mxu0 %v221
  %262 = vmatprep.subr.bf16.mxu0 0
  %263 = vmatpush1.bf16.msra.mxu0 %v222
  %264 = vmatprep.subr.bf16.mxu0 0
  %265 = vmatpush1.bf16.msra.mxu0 %v223
  %266 = vmatprep.subr.bf16.mxu0 0
  %267 = vmatpush1.bf16.msra.mxu0 %v224
  %268 = vmatprep.subr.bf16.mxu0 0
  %269 = vmatpush1.bf16.msra.mxu0 %v225
  %270 = vmatprep.subr.bf16.mxu0 0
  %271 = vmatpush1.bf16.msra.mxu0 %v226
  %272 = vmatprep.subr.bf16.mxu0 0
  %273 = vmatpush1.bf16.msra.mxu0 %v227
  %274 = vmatprep.subr.bf16.mxu0 0
  %275 = vmatpush1.bf16.msra.mxu0 %v228
  %276 = vmatprep.subr.bf16.mxu0 0
  %277 = vmatpush1.bf16.msra.mxu0 %v229
  %278 = vmatprep.mubr.bf16.mxu0 %v119
  %279 = vmatmul.mubr.bf16.gmra.mrb[0].mxu0 %v118
  %v280 = vpop.f32.mrb[0].mxu0
  %v281 = vadd.f32 %v68, %v280
  %v282 = vpop.f32.mrb[0].mxu0
  %v283 = vpop.f32.mrb[0].mxu0
  %v284 = vadd.f32 %v68, %v283
  %v285 = vpop.f32.mrb[0].mxu0
  %286 = vmatprep.mubr.bf16.mxu0 %v121
  %287 = vmatmul.mubr.bf16.gmra.mrb[0].mxu0 %v120
  %v288 = vpop.f32.mrb[0].mxu0
  %v289 = vadd.f32 %v68, %v288
  %v290 = vpop.f32.mrb[0].mxu0
  %v291 = vpop.f32.mrb[0].mxu0
  %v292 = vadd.f32 %v68, %v291
  %v293 = vpop.f32.mrb[0].mxu0
  %294 = vmatprep.mubr.bf16.mxu0 %v123
  %295 = vmatmul.mubr.bf16.gmra.mrb[0].mxu0 %v122
  %v296 = vpop.f32.mrb[0].mxu0
  %v297 = vadd.f32 %v68, %v296
  %v298 = vpop.f32.mrb[0].mxu0
  %v299 = vpop.f32.mrb[0].mxu0
  %v300 = vadd.f32 %v68, %v299
  %v301 = vpop.f32.mrb[0].mxu0
  %302 = vmatprep.mubr.bf16.mxu0 %v125
  %303 = vmatmul.mubr.bf16.gmra.mrb[0].mxu0 %v124
  %v304 = vpop.f32.mrb[0].mxu0
  %v305 = vadd.f32 %v68, %v304
  %v306 = vpop.f32.mrb[0].mxu0
  %v307 = vpop.f32.mrb[0].mxu0
  %v308 = vadd.f32 %v68, %v307
  %v309 = vpop.f32.mrb[0].mxu0
  %310 = vmatprep.mubr.bf16.mxu0 %v127
  %311 = vmatmul.mubr.bf16.gmra.mrb[0].mxu0 %v126
  %v312 = vpop.f32.mrb[0].mxu0
  %v313 = vadd.f32 %v68, %v312
  %v314 = vpop.f32.mrb[0].mxu0
  %v315 = vpop.f32.mrb[0].mxu0
  %v316 = vadd.f32 %v68, %v315
  %v317 = vpop.f32.mrb[0].mxu0
  %318 = vmatprep.mubr.bf16.mxu0 %v129
  %319 = vmatmul.mubr.bf16.gmra.mrb[0].mxu0 %v128
  %v320 = vpop.f32.mrb[0].mxu0
  %v321 = vadd.f32 %v68, %v320
  %v322 = vpop.f32.mrb[0].mxu0
  %v323 = vpop.f32.mrb[0].mxu0
  %v324 = vadd.f32 %v68, %v323
  %v325 = vpop.f32.mrb[0].mxu0
  %326 = vmatprep.mubr.bf16.mxu0 %v131
  %327 = vmatmul.mubr.bf16.gmra.mrb[0].mxu0 %v130
  %v328 = vpop.f32.mrb[0].mxu0
  %v329 = vadd.f32 %v68, %v328
  %v330 = vpop.f32.mrb[0].mxu0
  %v331 = vpop.f32.mrb[0].mxu0
  %v332 = vadd.f32 %v68, %v331
  %v333 = vpop.f32.mrb[0].mxu0
  %334 = vmatprep.mubr.bf16.mxu0 %v133
  %335 = vmatmul.mubr.bf16.gmra.mrb[0].mxu0 %v132
  %v336 = vpop.f32.mrb[0].mxu0
  %v337 = vadd.f32 %v68, %v336
  %v338 = vpop.f32.mrb[0].mxu0
  %v339 = vpop.f32.mrb[0].mxu0
  %v340 = vadd.f32 %v68, %v339
  %v341 = vpop.f32.mrb[0].mxu0
  %342 = vdwg.mxu0
  %v343 = vmax.f32 %v281, 0.0
  %v344 = vmax.f32 %v284, 0.0
  %v345 = vmax.f32 %v289, 0.0
  %v346 = vmax.f32 %v292, 0.0
  %v347 = vmax.f32 %v297, 0.0
  %v348 = vmax.f32 %v300, 0.0
  %v349 = vmax.f32 %v305, 0.0
  %v350 = vmax.f32 %v308, 0.0
  %v351 = vmax.f32 %v313, 0.0
  %v352 = vmax.f32 %v316, 0.0
  %v353 = vmax.f32 %v321, 0.0
  %v354 = vmax.f32 %v324, 0.0
  %v355 = vmax.f32 %v329, 0.0
  %v356 = vmax.f32 %v332, 0.0
  %v357 = vmax.f32 %v337, 0.0
  %v358 = vmax.f32 %v340, 0.0
  %v359 = vpack.c.bf16 %v344, %v343
  %v360 = vpack.c.bf16 %v346, %v345
  %v361 = vpack.c.bf16 %v348, %v347
  %v362 = vpack.c.bf16 %v350, %v349
  %v363 = vpack.c.bf16 %v352, %v351
  %v364 = vpack.c.bf16 %v354, %v353
  %v365 = vpack.c.bf16 %v356, %v355
  %v366 = vpack.c.bf16 %v358, %v357
  %v375 = vunpack.c.l.b16 %v359
  %v376 = vunpack.c.h.b16 %v359
  %v377 = vunpack.c.l.b16 %v360
  %v378 = vunpack.c.h.b16 %v360
  %v379 = vunpack.c.l.b16 %v361
  %v380 = vunpack.c.h.b16 %v361
  %v381 = vunpack.c.l.b16 %v362
  %v382 = vunpack.c.h.b16 %v362
  %v383 = vunpack.c.l.b16 %v363
  %v384 = vunpack.c.h.b16 %v363
  %v385 = vunpack.c.l.b16 %v364
  %v386 = vunpack.c.h.b16 %v364
  %v387 = vunpack.c.l.b16 %v365
  %v388 = vunpack.c.h.b16 %v365
  %v389 = vunpack.c.l.b16 %v366
  %v390 = vunpack.c.h.b16 %v366
  %v391 = vpack.c.b16 %v375, %v375
  %v392 = vpack.c.b16 %v376, %v376
  %v393 = vpack.c.b16 %v377, %v377
  %v394 = vpack.c.b16 %v378, %v378
  %v395 = vpack.c.b16 %v379, %v379
  %v396 = vpack.c.b16 %v380, %v380
  %v397 = vpack.c.b16 %v381, %v381
  %v398 = vpack.c.b16 %v382, %v382
  %v399 = vpack.c.b16 %v383, %v383
  %v400 = vpack.c.b16 %v384, %v384
  %v401 = vpack.c.b16 %v385, %v385
  %v402 = vpack.c.b16 %v386, %v386
  %v403 = vpack.c.b16 %v387, %v387
  %v404 = vpack.c.b16 %v388, %v388
  %v405 = vpack.c.b16 %v389, %v389
  %v406 = vpack.c.b16 %v390, %v390
  %423 = vst [vmem:[%s3] sm:$0xf] %v391
  %424 = vst [vmem:[%s3 + $0x4] sm:$0xf] %v392
  %425 = vst [vmem:[%s3 + $0x8] sm:$0xf] %v393
  %426 = vst [vmem:[%s3 + $0xc] sm:$0xf] %v394
  %427 = vst [vmem:[%s3 + $0x10] sm:$0xf] %v395
  %428 = vst [vmem:[%s3 + $0x14] sm:$0xf] %v396
  %429 = vst [vmem:[%s3 + $0x18] sm:$0xf] %v397
  %430 = vst [vmem:[%s3 + $0x1c] sm:$0xf] %v398
  %431 = vst [vmem:[%s3 + $0x20] sm:$0xf] %v399
  %432 = vst [vmem:[%s3 + $0x24] sm:$0xf] %v400
  %433 = vst [vmem:[%s3 + $0x28] sm:$0xf] %v401
  %434 = vst [vmem:[%s3 + $0x2c] sm:$0xf] %v402
  %435 = vst [vmem:[%s3 + $0x30] sm:$0xf] %v403
  %436 = vst [vmem:[%s3 + $0x34] sm:$0xf] %v404
  %437 = vst [vmem:[%s3 + $0x38] sm:$0xf] %v405
  %438 = vst [vmem:[%s3 + $0x3c] sm:$0xf] %v406
  // Predicated region
  $region14: #{dqn_forward.4} parent=0 // pred_check
    _
  $region15: #{dqn_forward.4} parent=0 // pred_check_branch
    %440 = sbr.rel (0) target = $region17
  $region16: #{dqn_forward.4} parent=0 // pred_region
    _
  $region17: #{dqn_forward.4} parent=0 // pred_fallthru
    _
  // Predicated region
  $region18: #{dqn_forward.4} parent=0 // pred_check
    _
  $region19: #{dqn_forward.4} parent=0 // pred_check_branch
    %442 = sbr.rel (0) target = $region21
  $region20: #{dqn_forward.4} parent=0 // pred_region
    _
  $region21: #{dqn_forward.4} parent=0 // pred_fallthru
    _

// kernel: dqn_forward.5
$region0: #{dqn_forward.5}
  #allocation0 [shape = 'u32[]', space=smem, size = 0x4, offset = 0x4, fixed_abs, tag = 'smem constant byte address 0x4 - core index']
  #allocation1 [shape = 'u32[144,128]{1,0:T(1,128)}', space=vmem, size = 0x12000, scoped, tag = 'internal scratch']
  %s0 = inlined_call_operand.vmem [shape: bf16[32,512], index: 0, kind: input, shape index: {}]
  %s1 = inlined_call_operand.vmem [shape: bf16[512,128], index: 1, kind: input, shape index: {}]
  %s2 = inlined_call_operand.vmem [shape: f32[1,128], index: 2, kind: input, shape index: {}]
  %s3 = inlined_call_operand.vmem [shape: bf16[32,128], index: 3, kind: output, shape index: {}]
  %s4 = sld [smem:[#allocation0]]
  $region22: #{dqn_forward.5} parent=0
    _
  %s6 = ssub.s32 1, %s4
  %s7 = scalar_select 0, %s6, %s4
  // Predicated region
  $region2: #{dqn_forward.5} parent=0 // pred_check
    _
  $region3: #{dqn_forward.5} parent=0 // pred_check_branch
    %9 = sbr.rel (0) target = $region5
  $region4: #{dqn_forward.5} parent=0 // pred_region
    _
  $region5: #{dqn_forward.5} parent=0 // pred_fallthru
    _
  // Predicated region
  $region6: #{dqn_forward.5} parent=0 // pred_check
    _
  $region7: #{dqn_forward.5} parent=0 // pred_check_branch
    %11 = sbr.rel (0) target = $region9
  $region8: #{dqn_forward.5} parent=0 // pred_region
    _
  $region9: #{dqn_forward.5} parent=0 // pred_fallthru
    _
  // Predicated region
  $region10: #{dqn_forward.5} parent=0 // pred_check
    _
  $region11: #{dqn_forward.5} parent=0 // pred_check_branch
    %13 = sbr.rel (0) target = $region13
  $region12: #{dqn_forward.5} parent=0 // pred_region
    _
  $region13: #{dqn_forward.5} parent=0 // pred_fallthru
    _
  %v15 = vld [vmem:[%s0] sm:$0xff]
  %v16 = vld [vmem:[%s0 + $0x8] sm:$0xff]
  %v17 = vld [vmem:[%s0 + $0x10] sm:$0xff]
  %v18 = vld [vmem:[%s0 + $0x18] sm:$0xff]
  %v19 = vld [vmem:[%s0 + $0x20] sm:$0xff]
  %v20 = vld [vmem:[%s0 + $0x28] sm:$0xff]
  %v21 = vld [vmem:[%s0 + $0x30] sm:$0xff]
  %v22 = vld [vmem:[%s0 + $0x38] sm:$0xff]
  %v23 = vld [vmem:[%s1] sm:$0xf]
  %v24 = vld [vmem:[%s1 + $0x4] sm:$0xf]
  %v25 = vld [vmem:[%s1 + $0x8] sm:$0xf]
  %v26 = vld [vmem:[%s1 + $0xc] sm:$0xf]
  %v27 = vld [vmem:[%s1 + $0x10] sm:$0xf]
  %v28 = vld [vmem:[%s1 + $0x14] sm:$0xf]
  %v29 = vld [vmem:[%s1 + $0x18] sm:$0xf]
  %v30 = vld [vmem:[%s1 + $0x1c] sm:$0xf]
  %v31 = vld [vmem:[%s1 + $0x20] sm:$0xf]
  %v32 = vld [vmem:[%s1 + $0x24] sm:$0xf]
  %v33 = vld [vmem:[%s1 + $0x28] sm:$0xf]
  %v34 = vld [vmem:[%s1 + $0x2c] sm:$0xf]
  %v35 = vld [vmem:[%s1 + $0x30] sm:$0xf]
  %v36 = vld [vmem:[%s1 + $0x34] sm:$0xf]
  %v37 = vld [vmem:[%s1 + $0x38] sm:$0xf]
  %v38 = vld [vmem:[%s1 + $0x3c] sm:$0xf]
  %v39 = vld [vmem:[%s1 + $0x40] sm:$0xf]
  %v40 = vld [vmem:[%s1 + $0x44] sm:$0xf]
  %v41 = vld [vmem:[%s1 + $0x48] sm:$0xf]
  %v42 = vld [vmem:[%s1 + $0x4c] sm:$0xf]
  %v43 = vld [vmem:[%s1 + $0x50] sm:$0xf]
  %v44 = vld [vmem:[%s1 + $0x54] sm:$0xf]
  %v45 = vld [vmem:[%s1 + $0x58] sm:$0xf]
  %v46 = vld [vmem:[%s1 + $0x5c] sm:$0xf]
  %v47 = vld [vmem:[%s1 + $0x60] sm:$0xf]
  %v48 = vld [vmem:[%s1 + $0x64] sm:$0xf]
  %v49 = vld [vmem:[%s1 + $0x68] sm:$0xf]
  %v50 = vld [vmem:[%s1 + $0x6c] sm:$0xf]
  %v51 = vld [vmem:[%s1 + $0x70] sm:$0xf]
  %v52 = vld [vmem:[%s1 + $0x74] sm:$0xf]
  %v53 = vld [vmem:[%s1 + $0x78] sm:$0xf]
  %v54 = vld [vmem:[%s1 + $0x7c] sm:$0xf]
  %v55 = vld [vmem:[%s1 + $0x80] sm:$0xf]
  %v56 = vld [vmem:[%s1 + $0x84] sm:$0xf]
  %v57 = vld [vmem:[%s1 + $0x88] sm:$0xf]
  %v58 = vld [vmem:[%s1 + $0x8c] sm:$0xf]
  %v59 = vld [vmem:[%s1 + $0x90] sm:$0xf]
  %v60 = vld [vmem:[%s1 + $0x94] sm:$0xf]
  %v61 = vld [vmem:[%s1 + $0x98] sm:$0xf]
  %v62 = vld [vmem:[%s1 + $0x9c] sm:$0xf]
  %v63 = vld [vmem:[%s1 + $0xa0] sm:$0xf]
  %v64 = vld [vmem:[%s1 + $0xa4] sm:$0xf]
  %v65 = vld [vmem:[%s1 + $0xa8] sm:$0xf]
  %v66 = vld [vmem:[%s1 + $0xac] sm:$0xf]
  %v67 = vld [vmem:[%s1 + $0xb0] sm:$0xf]
  %v68 = vld [vmem:[%s1 + $0xb4] sm:$0xf]
  %v69 = vld [vmem:[%s1 + $0xb8] sm:$0xf]
  %v70 = vld [vmem:[%s1 + $0xbc] sm:$0xf]
  %v71 = vld [vmem:[%s1 + $0xc0] sm:$0xf]
  %v72 = vld [vmem:[%s1 + $0xc4] sm:$0xf]
  %v73 = vld [vmem:[%s1 + $0xc8] sm:$0xf]
  %v74 = vld [vmem:[%s1 + $0xcc] sm:$0xf]
  %v75 = vld [vmem:[%s1 + $0xd0] sm:$0xf]
  %v76 = vld [vmem:[%s1 + $0xd4] sm:$0xf]
  %v77 = vld [vmem:[%s1 + $0xd8] sm:$0xf]
  %v78 = vld [vmem:[%s1 + $0xdc] sm:$0xf]
  %v79 = vld [vmem:[%s1 + $0xe0] sm:$0xf]
  %v80 = vld [vmem:[%s1 + $0xe4] sm:$0xf]
  %v81 = vld [vmem:[%s1 + $0xe8] sm:$0xf]
  %v82 = vld [vmem:[%s1 + $0xec] sm:$0xf]
  %v83 = vld [vmem:[%s1 + $0xf0] sm:$0xf]
  %v84 = vld [vmem:[%s1 + $0xf4] sm:$0xf]
  %v85 = vld [vmem:[%s1 + $0xf8] sm:$0xf]
  %v86 = vld [vmem:[%s1 + $0xfc] sm:$0xf]
  %v87 = vld [vmem:[%s2] sm:$0x1]
  %v89 = vlaneseq
  %v90 = vshrl.u32 %v89, 7
  %v91 = vsub.s32 0, %v90
  %v92 = vrot.slane %v87, %v91
  %v102 = vunpack.c.l.b16 %v15
  %v103 = vunpack.c.h.b16 %v15
  %v104 = vunpack.c.l.b16 %v16
  %v105 = vunpack.c.h.b16 %v16
  %v106 = vunpack.c.l.b16 %v17
  %v107 = vunpack.c.h.b16 %v17
  %v108 = vunpack.c.l.b16 %v18
  %v109 = vunpack.c.h.b16 %v18
  %v110 = vunpack.c.l.b16 %v19
  %v111 = vunpack.c.h.b16 %v19
  %v112 = vunpack.c.l.b16 %v20
  %v113 = vunpack.c.h.b16 %v20
  %v114 = vunpack.c.l.b16 %v21
  %v115 = vunpack.c.h.b16 %v21
  %v116 = vunpack.c.l.b16 %v22
  %v117 = vunpack.c.h.b16 %v22
  %v118 = vpack.c.b16 %v106, %v102
  %v119 = vpack.c.b16 %v107, %v103
  %v120 = vpack.c.b16 %v108, %v104
  %v121 = vpack.c.b16 %v109, %v105
  %v122 = vpack.c.b16 %v114, %v110
  %v123 = vpack.c.b16 %v115, %v111
  %v124 = vpack.c.b16 %v116, %v112
  %v125 = vpack.c.b16 %v117, %v113
  %v198 = vunpack.c.l.b16 %v23
  %v199 = vunpack.c.l.b16 %v24
  %v200 = vunpack.c.l.b16 %v25
  %v201 = vunpack.c.l.b16 %v26
  %v202 = vunpack.c.l.b16 %v27
  %v203 = vunpack.c.l.b16 %v28
  %v204 = vunpack.c.l.b16 %v29
  %v205 = vunpack.c.l.b16 %v30
  %v206 = vunpack.c.l.b16 %v31
  %v207 = vunpack.c.l.b16 %v32
  %v208 = vunpack.c.l.b16 %v33
  %v209 = vunpack.c.l.b16 %v34
  %v210 = vunpack.c.l.b16 %v35
  %v211 = vunpack.c.l.b16 %v36
  %v212 = vunpack.c.l.b16 %v37
  %v213 = vunpack.c.l.b16 %v38
  %v214 = vunpack.c.l.b16 %v39
  %v215 = vunpack.c.l.b16 %v40
  %v216 = vunpack.c.l.b16 %v41
  %v217 = vunpack.c.l.b16 %v42
  %v218 = vunpack.c.l.b16 %v43
  %v219 = vunpack.c.l.b16 %v44
  %v220 = vunpack.c.l.b16 %v45
  %v221 = vunpack.c.l.b16 %v46
  %v222 = vunpack.c.l.b16 %v47
  %v223 = vunpack.c.l.b16 %v48
  %v224 = vunpack.c.l.b16 %v49
  %v225 = vunpack.c.l.b16 %v50
  %v226 = vunpack.c.l.b16 %v51
  %v227 = vunpack.c.l.b16 %v52
  %v228 = vunpack.c.l.b16 %v53
  %v229 = vunpack.c.l.b16 %v54
  %v230 = vunpack.c.l.b16 %v55
  %v231 = vunpack.c.l.b16 %v56
  %v232 = vunpack.c.l.b16 %v57
  %v233 = vunpack.c.l.b16 %v58
  %v234 = vunpack.c.l.b16 %v59
  %v235 = vunpack.c.l.b16 %v60
  %v236 = vunpack.c.l.b16 %v61
  %v237 = vunpack.c.l.b16 %v62
  %v238 = vunpack.c.l.b16 %v63
  %v239 = vunpack.c.l.b16 %v64
  %v240 = vunpack.c.l.b16 %v65
  %v241 = vunpack.c.l.b16 %v66
  %v242 = vunpack.c.l.b16 %v67
  %v243 = vunpack.c.l.b16 %v68
  %v244 = vunpack.c.l.b16 %v69
  %v245 = vunpack.c.l.b16 %v70
  %v246 = vunpack.c.l.b16 %v71
  %v247 = vunpack.c.l.b16 %v72
  %v248 = vunpack.c.l.b16 %v73
  %v249 = vunpack.c.l.b16 %v74
  %v250 = vunpack.c.l.b16 %v75
  %v251 = vunpack.c.l.b16 %v76
  %v252 = vunpack.c.l.b16 %v77
  %v253 = vunpack.c.l.b16 %v78
  %v254 = vunpack.c.l.b16 %v79
  %v255 = vunpack.c.l.b16 %v80
  %v256 = vunpack.c.l.b16 %v81
  %v257 = vunpack.c.l.b16 %v82
  %v258 = vunpack.c.l.b16 %v83
  %v259 = vunpack.c.l.b16 %v84
  %v260 = vunpack.c.l.b16 %v85
  %v261 = vunpack.c.l.b16 %v86
  %v262 = vpack.c.b16 %v199, %v198
  %v263 = vpack.c.b16 %v201, %v200
  %v264 = vpack.c.b16 %v203, %v202
  %v265 = vpack.c.b16 %v205, %v204
  %v266 = vpack.c.b16 %v207, %v206
  %v267 = vpack.c.b16 %v209, %v208
  %v268 = vpack.c.b16 %v211, %v210
  %v269 = vpack.c.b16 %v213, %v212
  %v270 = vpack.c.b16 %v215, %v214
  %v271 = vpack.c.b16 %v217, %v216
  %v272 = vpack.c.b16 %v219, %v218
  %v273 = vpack.c.b16 %v221, %v220
  %v274 = vpack.c.b16 %v223, %v222
  %v275 = vpack.c.b16 %v225, %v224
  %v276 = vpack.c.b16 %v227, %v226
  %v277 = vpack.c.b16 %v229, %v228
  %v278 = vpack.c.b16 %v231, %v230
  %v279 = vpack.c.b16 %v233, %v232
  %v280 = vpack.c.b16 %v235, %v234
  %v281 = vpack.c.b16 %v237, %v236
  %v282 = vpack.c.b16 %v239, %v238
  %v283 = vpack.c.b16 %v241, %v240
  %v284 = vpack.c.b16 %v243, %v242
  %v285 = vpack.c.b16 %v245, %v244
  %v286 = vpack.c.b16 %v247, %v246
  %v287 = vpack.c.b16 %v249, %v248
  %v288 = vpack.c.b16 %v251, %v250
  %v289 = vpack.c.b16 %v253, %v252
  %v290 = vpack.c.b16 %v255, %v254
  %v291 = vpack.c.b16 %v257, %v256
  %v292 = vpack.c.b16 %v259, %v258
  %v293 = vpack.c.b16 %v261, %v260
  %326 = vmatprep.subr.bf16.mxu0 0
  %327 = vmatpush1.bf16.msra.mxu0 %v262
  %328 = vmatprep.subr.bf16.mxu0 0
  %329 = vmatpush1.bf16.msra.mxu0 %v263
  %330 = vmatprep.subr.bf16.mxu0 0
  %331 = vmatpush1.bf16.msra.mxu0 %v264
  %332 = vmatprep.subr.bf16.mxu0 0
  %333 = vmatpush1.bf16.msra.mxu0 %v265
  %334 = vmatprep.subr.bf16.mxu0 0
  %335 = vmatpush1.bf16.msra.mxu0 %v266
  %336 = vmatprep.subr.bf16.mxu0 0
  %337 = vmatpush1.bf16.msra.mxu0 %v267
  %338 = vmatprep.subr.bf16.mxu0 0
  %339 = vmatpush1.bf16.msra.mxu0 %v268
  %340 = vmatprep.subr.bf16.mxu0 0
  %341 = vmatpush1.bf16.msra.mxu0 %v269
  %342 = vmatprep.subr.bf16.mxu0 0
  %343 = vmatpush1.bf16.msra.mxu0 %v270
  %344 = vmatprep.subr.bf16.mxu0 0
  %345 = vmatpush1.bf16.msra.mxu0 %v271
  %346 = vmatprep.subr.bf16.mxu0 0
  %347 = vmatpush1.bf16.msra.mxu0 %v272
  %348 = vmatprep.subr.bf16.mxu0 0
  %349 = vmatpush1.bf16.msra.mxu0 %v273
  %350 = vmatprep.subr.bf16.mxu0 0
  %351 = vmatpush1.bf16.msra.mxu0 %v274
  %352 = vmatprep.subr.bf16.mxu0 0
  %353 = vmatpush1.bf16.msra.mxu0 %v275
  %354 = vmatprep.subr.bf16.mxu0 0
  %355 = vmatpush1.bf16.msra.mxu0 %v276
  %356 = vmatprep.subr.bf16.mxu0 0
  %357 = vmatpush1.bf16.msra.mxu0 %v277
  %358 = vmatprep.mubr.bf16.mxu0 %v119
  %359 = vmatmul.mubr.bf16.gmra.mrb[0].mxu0 %v118
  %v360 = vpop.f32.mrb[0].mxu0
  %v361 = vadd.f32 %v92, %v360
  %v362 = vpop.f32.mrb[0].mxu0
  %v363 = vpop.f32.mrb[0].mxu0
  %v364 = vadd.f32 %v92, %v363
  %v365 = vpop.f32.mrb[0].mxu0
  %366 = vmatprep.mubr.bf16.mxu0 %v123
  %367 = vmatmul.mubr.bf16.gmra.mrb[0].mxu0 %v122
  %v368 = vpop.f32.mrb[0].mxu0
  %v369 = vadd.f32 %v92, %v368
  %v370 = vpop.f32.mrb[0].mxu0
  %v371 = vpop.f32.mrb[0].mxu0
  %v372 = vadd.f32 %v92, %v371
  %v373 = vpop.f32.mrb[0].mxu0
  %374 = vdwg.mxu0
  %375 = vmatprep.subr.bf16.mxu0 0
  %376 = vmatpush1.bf16.msra.mxu0 %v278
  %377 = vmatprep.subr.bf16.mxu0 0
  %378 = vmatpush1.bf16.msra.mxu0 %v279
  %379 = vmatprep.subr.bf16.mxu0 0
  %380 = vmatpush1.bf16.msra.mxu0 %v280
  %381 = vmatprep.subr.bf16.mxu0 0
  %382 = vmatpush1.bf16.msra.mxu0 %v281
  %383 = vmatprep.subr.bf16.mxu0 0
  %384 = vmatpush1.bf16.msra.mxu0 %v282
  %385 = vmatprep.subr.bf16.mxu0 0
  %386 = vmatpush1.bf16.msra.mxu0 %v283
  %387 = vmatprep.subr.bf16.mxu0 0
  %388 = vmatpush1.bf16.msra.mxu0 %v284
  %389 = vmatprep.subr.bf16.mxu0 0
  %390 = vmatpush1.bf16.msra.mxu0 %v285
  %391 = vmatprep.subr.bf16.mxu0 0
  %392 = vmatpush1.bf16.msra.mxu0 %v286
  %393 = vmatprep.subr.bf16.mxu0 0
  %394 = vmatpush1.bf16.msra.mxu0 %v287
  %395 = vmatprep.subr.bf16.mxu0 0
  %396 = vmatpush1.bf16.msra.mxu0 %v288
  %397 = vmatprep.subr.bf16.mxu0 0
  %398 = vmatpush1.bf16.msra.mxu0 %v289
  %399 = vmatprep.subr.bf16.mxu0 0
  %400 = vmatpush1.bf16.msra.mxu0 %v290
  %401 = vmatprep.subr.bf16.mxu0 0
  %402 = vmatpush1.bf16.msra.mxu0 %v291
  %403 = vmatprep.subr.bf16.mxu0 0
  %404 = vmatpush1.bf16.msra.mxu0 %v292
  %405 = vmatprep.subr.bf16.mxu0 0
  %406 = vmatpush1.bf16.msra.mxu0 %v293
  %407 = vmatprep.mubr.bf16.mxu0 %v121
  %408 = vmatmul.mubr.bf16.gmra.mrb[0].mxu0 %v120
  %v409 = vpop.f32.mrb[0].mxu0
  %v410 = vadd.f32 %v361, %v409
  %v411 = vpop.f32.mrb[0].mxu0
  %v412 = vpop.f32.mrb[0].mxu0
  %v413 = vadd.f32 %v364, %v412
  %v414 = vpop.f32.mrb[0].mxu0
  %415 = vmatprep.mubr.bf16.mxu0 %v125
  %416 = vmatmul.mubr.bf16.gmra.mrb[0].mxu0 %v124
  %v417 = vpop.f32.mrb[0].mxu0
  %v418 = vadd.f32 %v369, %v417
  %v419 = vpop.f32.mrb[0].mxu0
  %v420 = vpop.f32.mrb[0].mxu0
  %v421 = vadd.f32 %v372, %v420
  %v422 = vpop.f32.mrb[0].mxu0
  %423 = vdwg.mxu0
  %v424 = vmax.f32 %v410, 0.0
  %v425 = vmax.f32 %v413, 0.0
  %v426 = vmax.f32 %v418, 0.0
  %v427 = vmax.f32 %v421, 0.0
  %v428 = vpack.c.bf16 %v425, %v424
  %v429 = vpack.c.bf16 %v427, %v426
  %v432 = vunpack.c.l.b16 %v428
  %v433 = vunpack.c.h.b16 %v428
  %v434 = vunpack.c.l.b16 %v429
  %v435 = vunpack.c.h.b16 %v429
  %v436 = vpack.c.b16 %v432, %v432
  %v437 = vpack.c.b16 %v433, %v433
  %v438 = vpack.c.b16 %v434, %v434
  %v439 = vpack.c.b16 %v435, %v435
  %444 = vst [vmem:[%s3] sm:$0xf] %v436
  %445 = vst [vmem:[%s3 + $0x4] sm:$0xf] %v437
  %446 = vst [vmem:[%s3 + $0x8] sm:$0xf] %v438
  %447 = vst [vmem:[%s3 + $0xc] sm:$0xf] %v439
  // Predicated region
  $region14: #{dqn_forward.5} parent=0 // pred_check
    _
  $region15: #{dqn_forward.5} parent=0 // pred_check_branch
    %449 = sbr.rel (0) target = $region17
  $region16: #{dqn_forward.5} parent=0 // pred_region
    _
  $region17: #{dqn_forward.5} parent=0 // pred_fallthru
    _
  // Predicated region
  $region18: #{dqn_forward.5} parent=0 // pred_check
    _
  $region19: #{dqn_forward.5} parent=0 // pred_check_branch
    %451 = sbr.rel (0) target = $region21
  $region20: #{dqn_forward.5} parent=0 // pred_region
    _
  $region21: #{dqn_forward.5} parent=0 // pred_fallthru
    _

// kernel: dqn_forward.7
$region0: #{dqn_forward.7}
  #allocation0 [shape = 'u32[]', space=smem, size = 0x4, offset = 0x4, fixed_abs, tag = 'smem constant byte address 0x4 - core index']
  #allocation1 [shape = 'u32[144,128]{1,0:T(1,128)}', space=vmem, size = 0x12000, scoped, tag = 'internal scratch']
  %s0 = inlined_call_operand.vmem [shape: bf16[16,64], index: 0, kind: input, shape index: {}]
  %s1 = inlined_call_operand.vmem [shape: bf16[64,512], index: 1, kind: input, shape index: {}]
  %s2 = inlined_call_operand.vmem [shape: f32[1,512], index: 2, kind: input, shape index: {}]
  %s3 = inlined_call_operand.vmem [shape: bf16[512,128], index: 3, kind: input, shape index: {}]
  %s4 = inlined_call_operand.vmem [shape: f32[1,128], index: 4, kind: input, shape index: {}]
  %s5 = inlined_call_operand.vmem [shape: f32[16,128], index: 5, kind: output, shape index: {}]
  %s6 = sld [smem:[#allocation0]]
  $region30: #{dqn_forward.7} parent=0
    _
  %s8 = ssub.s32 1, %s6
  %s9 = scalar_select 0, %s8, %s6
  // Predicated region
  $region2: #{dqn_forward.7} parent=0 // pred_check
    _
  $region3: #{dqn_forward.7} parent=0 // pred_check_branch
    %11 = sbr.rel (0) target = $region5
  $region4: #{dqn_forward.7} parent=0 // pred_region
    _
  $region5: #{dqn_forward.7} parent=0 // pred_fallthru
    _
  // Predicated region
  $region6: #{dqn_forward.7} parent=0 // pred_check
    _
  $region7: #{dqn_forward.7} parent=0 // pred_check_branch
    %13 = sbr.rel (0) target = $region9
  $region8: #{dqn_forward.7} parent=0 // pred_region
    _
  $region9: #{dqn_forward.7} parent=0 // pred_fallthru
    _
  // Predicated region
  $region10: #{dqn_forward.7} parent=0 // pred_check
    _
  $region11: #{dqn_forward.7} parent=0 // pred_check_branch
    %15 = sbr.rel (0) target = $region13
  $region12: #{dqn_forward.7} parent=0 // pred_region
    _
  $region13: #{dqn_forward.7} parent=0 // pred_fallthru
    _
  // Predicated region
  $region14: #{dqn_forward.7} parent=0 // pred_check
    _
  $region15: #{dqn_forward.7} parent=0 // pred_check_branch
    %17 = sbr.rel (0) target = $region17
  $region16: #{dqn_forward.7} parent=0 // pred_region
    _
  $region17: #{dqn_forward.7} parent=0 // pred_fallthru
    _
  // Predicated region
  $region18: #{dqn_forward.7} parent=0 // pred_check
    _
  $region19: #{dqn_forward.7} parent=0 // pred_check_branch
    %19 = sbr.rel (0) target = $region21
  $region20: #{dqn_forward.7} parent=0 // pred_region
    _
  $region21: #{dqn_forward.7} parent=0 // pred_fallthru
    _
  %v21 = vld [vmem:[%s0] sm:$0xf]
  %v22 = vld [vmem:[%s0 + $0x4] sm:$0xf]
  %v23 = vld [vmem:[%s1] sm:$0xff]
  %v24 = vld [vmem:[%s1 + $0x8] sm:$0xff]
  %v25 = vld [vmem:[%s1 + $0x10] sm:$0xff]
  %v26 = vld [vmem:[%s1 + $0x18] sm:$0xff]
  %v27 = vld [vmem:[%s1 + $0x20] sm:$0xff]
  %v28 = vld [vmem:[%s1 + $0x28] sm:$0xff]
  %v29 = vld [vmem:[%s1 + $0x30] sm:$0xff]
  %v30 = vld [vmem:[%s1 + $0x38] sm:$0xff]
  %v31 = vld [vmem:[%s1 + $0x40] sm:$0xff]
  %v32 = vld [vmem:[%s1 + $0x48] sm:$0xff]
  %v33 = vld [vmem:[%s1 + $0x50] sm:$0xff]
  %v34 = vld [vmem:[%s1 + $0x58] sm:$0xff]
  %v35 = vld [vmem:[%s1 + $0x60] sm:$0xff]
  %v36 = vld [vmem:[%s1 + $0x68] sm:$0xff]
  %v37 = vld [vmem:[%s1 + $0x70] sm:$0xff]
  %v38 = vld [vmem:[%s1 + $0x78] sm:$0xff]
  %v39 = vld [vmem:[%s2] sm:$0xf]
  %v41 = vlaneseq
  %v42 = vshrl.u32 %v41, 7
  %v43 = vsub.s32 0, %v42
  %v44 = vrot.slane %v39, %v43
  %v45 = vlaneseq
  %v46 = vshrl.u32 %v45, 7
  %v47 = vsub.s32 1, %v46
  %v48 = vrot.slane %v39, %v47
  %v49 = vlaneseq
  %v50 = vshrl.u32 %v49, 7
  %v51 = vsub.s32 2, %v50
  %v52 = vrot.slane %v39, %v51
  %v53 = vlaneseq
  %v54 = vshrl.u32 %v53, 7
  %v55 = vsub.s32 3, %v54
  %v56 = vrot.slane %v39, %v55
  %v63 = vunpack.c.l.b16 %v21
  %v64 = vunpack.c.l.b16 %v22
  %v65 = vpack.c.b16 %v64, %v63
  %v82 = vunpack.c.l.b16 %v23
  %v83 = vunpack.c.h.b16 %v23
  %v84 = vunpack.c.l.b16 %v24
  %v85 = vunpack.c.h.b16 %v24
  %v86 = vunpack.c.l.b16 %v25
  %v87 = vunpack.c.h.b16 %v25
  %v88 = vunpack.c.l.b16 %v26
  %v89 = vunpack.c.h.b16 %v26
  %v90 = vunpack.c.l.b16 %v27
  %v91 = vunpack.c.h.b16 %v27
  %v92 = vunpack.c.l.b16 %v28
  %v93 = vunpack.c.h.b16 %v28
  %v94 = vunpack.c.l.b16 %v29
  %v95 = vunpack.c.h.b16 %v29
  %v96 = vunpack.c.l.b16 %v30
  %v97 = vunpack.c.h.b16 %v30
  %v98 = vunpack.c.l.b16 %v31
  %v99 = vunpack.c.h.b16 %v31
  %v100 = vunpack.c.l.b16 %v32
  %v101 = vunpack.c.h.b16 %v32
  %v102 = vunpack.c.l.b16 %v33
  %v103 = vunpack.c.h.b16 %v33
  %v104 = vunpack.c.l.b16 %v34
  %v105 = vunpack.c.h.b16 %v34
  %v106 = vunpack.c.l.b16 %v35
  %v107 = vunpack.c.h.b16 %v35
  %v108 = vunpack.c.l.b16 %v36
  %v109 = vunpack.c.h.b16 %v36
  %v110 = vunpack.c.l.b16 %v37
  %v111 = vunpack.c.h.b16 %v37
  %v112 = vunpack.c.l.b16 %v38
  %v113 = vunpack.c.h.b16 %v38
  %v114 = vpack.c.b16 %v86, %v82
  %v115 = vpack.c.b16 %v87, %v83
  %v116 = vpack.c.b16 %v88, %v84
  %v117 = vpack.c.b16 %v89, %v85
  %v118 = vpack.c.b16 %v94, %v90
  %v119 = vpack.c.b16 %v95, %v91
  %v120 = vpack.c.b16 %v96, %v92
  %v121 = vpack.c.b16 %v97, %v93
  %v122 = vpack.c.b16 %v102, %v98
  %v123 = vpack.c.b16 %v103, %v99
  %v124 = vpack.c.b16 %v104, %v100
  %v125 = vpack.c.b16 %v105, %v101
  %v126 = vpack.c.b16 %v110, %v106
  %v127 = vpack.c.b16 %v111, %v107
  %v128 = vpack.c.b16 %v112, %v108
  %v129 = vpack.c.b16 %v113, %v109
  %vm146 = vcmask 523264
  %v148 = vsel %vm146, %v65, 0
  %150 = vmatprep.subr.bf16.mxu0 %v115
  %151 = vmatpush1.bf16.msra.mxu0 %v114
  %152 = vmatprep.subr.bf16.mxu0 %v119
  %153 = vmatpush1.bf16.msra.mxu0 %v118
  %154 = vmatprep.subr.bf16.mxu0 %v123
  %155 = vmatpush1.bf16.msra.mxu0 %v122
  %156 = vmatprep.subr.bf16.mxu0 %v127
  %157 = vmatpush1.bf16.msra.mxu0 %v126
  %158 = vmatprep.subr.bf16.mxu0 0
  %159 = vmatpush1.bf16.msra.mxu0 0
  %160 = vmatprep.subr.bf16.mxu0 0
  %161 = vmatpush1.bf16.msra.mxu0 0
  %162 = vmatprep.subr.bf16.mxu0 0
  %163 = vmatpush1.bf16.msra.mxu0 0
  %164 = vmatprep.subr.bf16.mxu0 0
  %165 = vmatpush1.bf16.msra.mxu0 0
  %166 = vmatprep.subr.bf16.mxu0 0
  %167 = vmatpush1.bf16.msra.mxu0 0
  %168 = vmatprep.subr.bf16.mxu0 0
  %169 = vmatpush1.bf16.msra.mxu0 0
  %170 = vmatprep.subr.bf16.mxu0 0
  %171 = vmatpush1.bf16.msra.mxu0 0
  %172 = vmatprep.subr.bf16.mxu0 0
  %173 = vmatpush1.bf16.msra.mxu0 0
  %174 = vmatprep.subr.bf16.mxu0 0
  %175 = vmatpush1.bf16.msra.mxu0 0
  %176 = vmatprep.subr.bf16.mxu0 0
  %177 = vmatpush1.bf16.msra.mxu0 0
  %178 = vmatprep.subr.bf16.mxu0 0
  %179 = vmatpush1.bf16.msra.mxu0 0
  %180 = vmatprep.subr.bf16.mxu0 0
  %181 = vmatpush1.bf16.msra.mxu0 0
  %182 = vmatprep.mubr.bf16.mxu0 0
  %183 = vmatmul.mubr.bf16.gmra.mrb[0].mxu0 %v148
  %v184 = vpop.f32.mrb[0].mxu0
  %v185 = vadd.f32 %v44, %v184
  %v186 = vpop.f32.mrb[0].mxu0
  %v187 = vadd.f32 %v48, %v186
  %v188 = vpop.f32.mrb[0].mxu0
  %v189 = vadd.f32 %v44, %v188
  %v190 = vpop.f32.mrb[0].mxu0
  %v191 = vadd.f32 %v48, %v190
  %192 = vdwg.mxu0
  %193 = vmatprep.subr.bf16.mxu0 %v117
  %194 = vmatpush1.bf16.msra.mxu0 %v116
  %195 = vmatprep.subr.bf16.mxu0 %v121
  %196 = vmatpush1.bf16.msra.mxu0 %v120
  %197 = vmatprep.subr.bf16.mxu0 %v125
  %198 = vmatpush1.bf16.msra.mxu0 %v124
  %199 = vmatprep.subr.bf16.mxu0 %v129
  %200 = vmatpush1.bf16.msra.mxu0 %v128
  %201 = vmatprep.subr.bf16.mxu0 0
  %202 = vmatpush1.bf16.msra.mxu0 0
  %203 = vmatprep.subr.bf16.mxu0 0
  %204 = vmatpush1.bf16.msra.mxu0 0
  %205 = vmatprep.subr.bf16.mxu0 0
  %206 = vmatpush1.bf16.msra.mxu0 0
  %207 = vmatprep.subr.bf16.mxu0 0
  %208 = vmatpush1.bf16.msra.mxu0 0
  %209 = vmatprep.subr.bf16.mxu0 0
  %210 = vmatpush1.bf16.msra.mxu0 0
  %211 = vmatprep.subr.bf16.mxu0 0
  %212 = vmatpush1.bf16.msra.mxu0 0
  %213 = vmatprep.subr.bf16.mxu0 0
  %214 = vmatpush1.bf16.msra.mxu0 0
  %215 = vmatprep.subr.bf16.mxu0 0
  %216 = vmatpush1.bf16.msra.mxu0 0
  %217 = vmatprep.subr.bf16.mxu0 0
  %218 = vmatpush1.bf16.msra.mxu0 0
  %219 = vmatprep.subr.bf16.mxu0 0
  %220 = vmatpush1.bf16.msra.mxu0 0
  %221 = vmatprep.subr.bf16.mxu0 0
  %222 = vmatpush1.bf16.msra.mxu0 0
  %223 = vmatprep.subr.bf16.mxu0 0
  %224 = vmatpush1.bf16.msra.mxu0 0
  %225 = vmatprep.mubr.bf16.mxu0 0
  %226 = vmatmul.mubr.bf16.gmra.mrb[0].mxu0 %v148
  %v227 = vpop.f32.mrb[0].mxu0
  %v228 = vadd.f32 %v52, %v227
  %v229 = vpop.f32.mrb[0].mxu0
  %v230 = vadd.f32 %v56, %v229
  %v231 = vpop.f32.mrb[0].mxu0
  %v232 = vadd.f32 %v52, %v231
  %v233 = vpop.f32.mrb[0].mxu0
  %v234 = vadd.f32 %v56, %v233
  %235 = vdwg.mxu0
  %v236 = vmax.f32 %v185, 0.0
  %v237 = vmax.f32 %v187, 0.0
  %v238 = vmax.f32 %v228, 0.0
  %v239 = vmax.f32 %v230, 0.0
  %v240 = vmax.f32 %v189, 0.0
  %v241 = vmax.f32 %v191, 0.0
  %v242 = vmax.f32 %v232, 0.0
  %v243 = vmax.f32 %v234, 0.0
  %v244 = vpack.c.bf16 %v240, %v236
  %v245 = vpack.c.bf16 %v241, %v237
  %v246 = vpack.c.bf16 %v242, %v238
  %v247 = vpack.c.bf16 %v243, %v239
  %v248 = vld [vmem:[%s3] sm:$0xf]
  %v249 = vld [vmem:[%s3 + $0x4] sm:$0xf]
  %v250 = vld [vmem:[%s3 + $0x8] sm:$0xf]
  %v251 = vld [vmem:[%s3 + $0xc] sm:$0xf]
  %v252 = vld [vmem:[%s3 + $0x10] sm:$0xf]
  %v253 = vld [vmem:[%s3 + $0x14] sm:$0xf]
  %v254 = vld [vmem:[%s3 + $0x18] sm:$0xf]
  %v255 = vld [vmem:[%s3 + $0x1c] sm:$0xf]
  %v256 = vld [vmem:[%s3 + $0x20] sm:$0xf]
  %v257 = vld [vmem:[%s3 + $0x24] sm:$0xf]
  %v258 = vld [vmem:[%s3 + $0x28] sm:$0xf]
  %v259 = vld [vmem:[%s3 + $0x2c] sm:$0xf]
  %v260 = vld [vmem:[%s3 + $0x30] sm:$0xf]
  %v261 = vld [vmem:[%s3 + $0x34] sm:$0xf]
  %v262 = vld [vmem:[%s3 + $0x38] sm:$0xf]
  %v263 = vld [vmem:[%s3 + $0x3c] sm:$0xf]
  %v264 = vld [vmem:[%s3 + $0x40] sm:$0xf]
  %v265 = vld [vmem:[%s3 + $0x44] sm:$0xf]
  %v266 = vld [vmem:[%s3 + $0x48] sm:$0xf]
  %v267 = vld [vmem:[%s3 + $0x4c] sm:$0xf]
  %v268 = vld [vmem:[%s3 + $0x50] sm:$0xf]
  %v269 = vld [vmem:[%s3 + $0x54] sm:$0xf]
  %v270 = vld [vmem:[%s3 + $0x58] sm:$0xf]
  %v271 = vld [vmem:[%s3 + $0x5c] sm:$0xf]
  %v272 = vld [vmem:[%s3 + $0x60] sm:$0xf]
  %v273 = vld [vmem:[%s3 + $0x64] sm:$0xf]
  %v274 = vld [vmem:[%s3 + $0x68] sm:$0xf]
  %v275 = vld [vmem:[%s3 + $0x6c] sm:$0xf]
  %v276 = vld [vmem:[%s3 + $0x70] sm:$0xf]
  %v277 = vld [vmem:[%s3 + $0x74] sm:$0xf]
  %v278 = vld [vmem:[%s3 + $0x78] sm:$0xf]
  %v279 = vld [vmem:[%s3 + $0x7c] sm:$0xf]
  %v280 = vld [vmem:[%s3 + $0x80] sm:$0xf]
  %v281 = vld [vmem:[%s3 + $0x84] sm:$0xf]
  %v282 = vld [vmem:[%s3 + $0x88] sm:$0xf]
  %v283 = vld [vmem:[%s3 + $0x8c] sm:$0xf]
  %v284 = vld [vmem:[%s3 + $0x90] sm:$0xf]
  %v285 = vld [vmem:[%s3 + $0x94] sm:$0xf]
  %v286 = vld [vmem:[%s3 + $0x98] sm:$0xf]
  %v287 = vld [vmem:[%s3 + $0x9c] sm:$0xf]
  %v288 = vld [vmem:[%s3 + $0xa0] sm:$0xf]
  %v289 = vld [vmem:[%s3 + $0xa4] sm:$0xf]
  %v290 = vld [vmem:[%s3 + $0xa8] sm:$0xf]
  %v291 = vld [vmem:[%s3 + $0xac] sm:$0xf]
  %v292 = vld [vmem:[%s3 + $0xb0] sm:$0xf]
  %v293 = vld [vmem:[%s3 + $0xb4] sm:$0xf]
  %v294 = vld [vmem:[%s3 + $0xb8] sm:$0xf]
  %v295 = vld [vmem:[%s3 + $0xbc] sm:$0xf]
  %v296 = vld [vmem:[%s3 + $0xc0] sm:$0xf]
  %v297 = vld [vmem:[%s3 + $0xc4] sm:$0xf]
  %v298 = vld [vmem:[%s3 + $0xc8] sm:$0xf]
  %v299 = vld [vmem:[%s3 + $0xcc] sm:$0xf]
  %v300 = vld [vmem:[%s3 + $0xd0] sm:$0xf]
  %v301 = vld [vmem:[%s3 + $0xd4] sm:$0xf]
  %v302 = vld [vmem:[%s3 + $0xd8] sm:$0xf]
  %v303 = vld [vmem:[%s3 + $0xdc] sm:$0xf]
  %v304 = vld [vmem:[%s3 + $0xe0] sm:$0xf]
  %v305 = vld [vmem:[%s3 + $0xe4] sm:$0xf]
  %v306 = vld [vmem:[%s3 + $0xe8] sm:$0xf]
  %v307 = vld [vmem:[%s3 + $0xec] sm:$0xf]
  %v308 = vld [vmem:[%s3 + $0xf0] sm:$0xf]
  %v309 = vld [vmem:[%s3 + $0xf4] sm:$0xf]
  %v310 = vld [vmem:[%s3 + $0xf8] sm:$0xf]
  %v311 = vld [vmem:[%s3 + $0xfc] sm:$0xf]
  %v312 = vld [vmem:[%s4] sm:$0x1]
  %v314 = vlaneseq
  %v315 = vshrl.u32 %v314, 7
  %v316 = vsub.s32 0, %v315
  %v317 = vrot.slane %v312, %v316
  %v383 = vunpack.c.l.b16 %v248
  %v384 = vunpack.c.l.b16 %v249
  %v385 = vunpack.c.l.b16 %v250
  %v386 = vunpack.c.l.b16 %v251
  %v387 = vunpack.c.l.b16 %v252
  %v388 = vunpack.c.l.b16 %v253
  %v389 = vunpack.c.l.b16 %v254
  %v390 = vunpack.c.l.b16 %v255
  %v391 = vunpack.c.l.b16 %v256
  %v392 = vunpack.c.l.b16 %v257
  %v393 = vunpack.c.l.b16 %v258
  %v394 = vunpack.c.l.b16 %v259
  %v395 = vunpack.c.l.b16 %v260
  %v396 = vunpack.c.l.b16 %v261
  %v397 = vunpack.c.l.b16 %v262
  %v398 = vunpack.c.l.b16 %v263
  %v399 = vunpack.c.l.b16 %v264
  %v400 = vunpack.c.l.b16 %v265
  %v401 = vunpack.c.l.b16 %v266
  %v402 = vunpack.c.l.b16 %v267
  %v403 = vunpack.c.l.b16 %v268
  %v404 = vunpack.c.l.b16 %v269
  %v405 = vunpack.c.l.b16 %v270
  %v406 = vunpack.c.l.b16 %v271
  %v407 = vunpack.c.l.b16 %v272
  %v408 = vunpack.c.l.b16 %v273
  %v409 = vunpack.c.l.b16 %v274
  %v410 = vunpack.c.l.b16 %v275
  %v411 = vunpack.c.l.b16 %v276
  %v412 = vunpack.c.l.b16 %v277
  %v413 = vunpack.c.l.b16 %v278
  %v414 = vunpack.c.l.b16 %v279
  %v415 = vunpack.c.l.b16 %v280
  %v416 = vunpack.c.l.b16 %v281
  %v417 = vunpack.c.l.b16 %v282
  %v418 = vunpack.c.l.b16 %v283
  %v419 = vunpack.c.l.b16 %v284
  %v420 = vunpack.c.l.b16 %v285
  %v421 = vunpack.c.l.b16 %v286
  %v422 = vunpack.c.l.b16 %v287
  %v423 = vunpack.c.l.b16 %v288
  %v424 = vunpack.c.l.b16 %v289
  %v425 = vunpack.c.l.b16 %v290
  %v426 = vunpack.c.l.b16 %v291
  %v427 = vunpack.c.l.b16 %v292
  %v428 = vunpack.c.l.b16 %v293
  %v429 = vunpack.c.l.b16 %v294
  %v430 = vunpack.c.l.b16 %v295
  %v431 = vunpack.c.l.b16 %v296
  %v432 = vunpack.c.l.b16 %v297
  %v433 = vunpack.c.l.b16 %v298
  %v434 = vunpack.c.l.b16 %v299
  %v435 = vunpack.c.l.b16 %v300
  %v436 = vunpack.c.l.b16 %v301
  %v437 = vunpack.c.l.b16 %v302
  %v438 = vunpack.c.l.b16 %v303
  %v439 = vunpack.c.l.b16 %v304
  %v440 = vunpack.c.l.b16 %v305
  %v441 = vunpack.c.l.b16 %v306
  %v442 = vunpack.c.l.b16 %v307
  %v443 = vunpack.c.l.b16 %v308
  %v444 = vunpack.c.l.b16 %v309
  %v445 = vunpack.c.l.b16 %v310
  %v446 = vunpack.c.l.b16 %v311
  %v447 = vpack.c.b16 %v384, %v383
  %v448 = vpack.c.b16 %v386, %v385
  %v449 = vpack.c.b16 %v388, %v387
  %v450 = vpack.c.b16 %v390, %v389
  %v451 = vpack.c.b16 %v392, %v391
  %v452 = vpack.c.b16 %v394, %v393
  %v453 = vpack.c.b16 %v396, %v395
  %v454 = vpack.c.b16 %v398, %v397
  %v455 = vpack.c.b16 %v400, %v399
  %v456 = vpack.c.b16 %v402, %v401
  %v457 = vpack.c.b16 %v404, %v403
  %v458 = vpack.c.b16 %v406, %v405
  %v459 = vpack.c.b16 %v408, %v407
  %v460 = vpack.c.b16 %v410, %v409
  %v461 = vpack.c.b16 %v412, %v411
  %v462 = vpack.c.b16 %v414, %v413
  %v463 = vpack.c.b16 %v416, %v415
  %v464 = vpack.c.b16 %v418, %v417
  %v465 = vpack.c.b16 %v420, %v419
  %v466 = vpack.c.b16 %v422, %v421
  %v467 = vpack.c.b16 %v424, %v423
  %v468 = vpack.c.b16 %v426, %v425
  %v469 = vpack.c.b16 %v428, %v427
  %v470 = vpack.c.b16 %v430, %v429
  %v471 = vpack.c.b16 %v432, %v431
  %v472 = vpack.c.b16 %v434, %v433
  %v473 = vpack.c.b16 %v436, %v435
  %v474 = vpack.c.b16 %v438, %v437
  %v475 = vpack.c.b16 %v440, %v439
  %v476 = vpack.c.b16 %v442, %v441
  %v477 = vpack.c.b16 %v444, %v443
  %v478 = vpack.c.b16 %v446, %v445
  %511 = vmatprep.subr.bf16.mxu0 0
  %512 = vmatpush1.bf16.msra.mxu0 %v447
  %513 = vmatprep.subr.bf16.mxu0 0
  %514 = vmatpush1.bf16.msra.mxu0 %v448
  %515 = vmatprep.subr.bf16.mxu0 0
  %516 = vmatpush1.bf16.msra.mxu0 %v449
  %517 = vmatprep.subr.bf16.mxu0 0
  %518 = vmatpush1.bf16.msra.mxu0 %v450
  %519 = vmatprep.subr.bf16.mxu0 0
  %520 = vmatpush1.bf16.msra.mxu0 %v451
  %521 = vmatprep.subr.bf16.mxu0 0
  %522 = vmatpush1.bf16.msra.mxu0 %v452
  %523 = vmatprep.subr.bf16.mxu0 0
  %524 = vmatpush1.bf16.msra.mxu0 %v453
  %525 = vmatprep.subr.bf16.mxu0 0
  %526 = vmatpush1.bf16.msra.mxu0 %v454
  %527 = vmatprep.subr.bf16.mxu0 0
  %528 = vmatpush1.bf16.msra.mxu0 %v455
  %529 = vmatprep.subr.bf16.mxu0 0
  %530 = vmatpush1.bf16.msra.mxu0 %v456
  %531 = vmatprep.subr.bf16.mxu0 0
  %532 = vmatpush1.bf16.msra.mxu0 %v457
  %533 = vmatprep.subr.bf16.mxu0 0
  %534 = vmatpush1.bf16.msra.mxu0 %v458
  %535 = vmatprep.subr.bf16.mxu0 0
  %536 = vmatpush1.bf16.msra.mxu0 %v459
  %537 = vmatprep.subr.bf16.mxu0 0
  %538 = vmatpush1.bf16.msra.mxu0 %v460
  %539 = vmatprep.subr.bf16.mxu0 0
  %540 = vmatpush1.bf16.msra.mxu0 %v461
  %541 = vmatprep.subr.bf16.mxu0 0
  %542 = vmatpush1.bf16.msra.mxu0 %v462
  %543 = vmatprep.mubr.bf16.mxu0 %v245
  %544 = vmatmul.mubr.bf16.gmra.mrb[0].mxu0 %v244
  %v545 = vpop.f32.mrb[0].mxu0
  %v546 = vadd.f32 %v317, %v545
  %v547 = vpop.f32.mrb[0].mxu0
  %v548 = vpop.f32.mrb[0].mxu0
  %v549 = vadd.f32 %v317, %v548
  %v550 = vpop.f32.mrb[0].mxu0
  %551 = vdwg.mxu0
  %552 = vmatprep.subr.bf16.mxu0 0
  %553 = vmatpush1.bf16.msra.mxu0 %v463
  %554 = vmatprep.subr.bf16.mxu0 0
  %555 = vmatpush1.bf16.msra.mxu0 %v464
  %556 = vmatprep.subr.bf16.mxu0 0
  %557 = vmatpush1.bf16.msra.mxu0 %v465
  %558 = vmatprep.subr.bf16.mxu0 0
  %559 = vmatpush1.bf16.msra.mxu0 %v466
  %560 = vmatprep.subr.bf16.mxu0 0
  %561 = vmatpush1.bf16.msra.mxu0 %v467
  %562 = vmatprep.subr.bf16.mxu0 0
  %563 = vmatpush1.bf16.msra.mxu0 %v468
  %564 = vmatprep.subr.bf16.mxu0 0
  %565 = vmatpush1.bf16.msra.mxu0 %v469
  %566 = vmatprep.subr.bf16.mxu0 0
  %567 = vmatpush1.bf16.msra.mxu0 %v470
  %568 = vmatprep.subr.bf16.mxu0 0
  %569 = vmatpush1.bf16.msra.mxu0 %v471
  %570 = vmatprep.subr.bf16.mxu0 0
  %571 = vmatpush1.bf16.msra.mxu0 %v472
  %572 = vmatprep.subr.bf16.mxu0 0
  %573 = vmatpush1.bf16.msra.mxu0 %v473
  %574 = vmatprep.subr.bf16.mxu0 0
  %575 = vmatpush1.bf16.msra.mxu0 %v474
  %576 = vmatprep.subr.bf16.mxu0 0
  %577 = vmatpush1.bf16.msra.mxu0 %v475
  %578 = vmatprep.subr.bf16.mxu0 0
  %579 = vmatpush1.bf16.msra.mxu0 %v476
  %580 = vmatprep.subr.bf16.mxu0 0
  %581 = vmatpush1.bf16.msra.mxu0 %v477
  %582 = vmatprep.subr.bf16.mxu0 0
  %583 = vmatpush1.bf16.msra.mxu0 %v478
  %584 = vmatprep.mubr.bf16.mxu0 %v247
  %585 = vmatmul.mubr.bf16.gmra.mrb[0].mxu0 %v246
  %v586 = vpop.f32.mrb[0].mxu0
  %v587 = vadd.f32 %v546, %v586
  %v588 = vpop.f32.mrb[0].mxu0
  %v589 = vpop.f32.mrb[0].mxu0
  %v590 = vadd.f32 %v549, %v589
  %v591 = vpop.f32.mrb[0].mxu0
  %592 = vdwg.mxu0
  %593 = vst [vmem:[%s5] sm:$0xff] %v587
  %594 = vst [vmem:[%s5 + $0x8] sm:$0xff] %v590
  // Predicated region
  $region22: #{dqn_forward.7} parent=0 // pred_check
    _
  $region23: #{dqn_forward.7} parent=0 // pred_check_branch
    %596 = sbr.rel (0) target = $region25
  $region24: #{dqn_forward.7} parent=0 // pred_region
    _
  $region25: #{dqn_forward.7} parent=0 // pred_fallthru
    _
  // Predicated region
  $region26: #{dqn_forward.7} parent=0 // pred_check
    _
  $region27: #{dqn_forward.7} parent=0 // pred_check_branch
    %598 = sbr.rel (0) target = $region29
  $region28: #{dqn_forward.7} parent=0 // pred_region
    _
  $region29: #{dqn_forward.7} parent=0 // pred_fallthru
    _

// kernel: dqn_forward.6
$region0: #{dqn_forward.6}
  #allocation0 [shape = 'u32[]', space=smem, size = 0x4, offset = 0x4, fixed_abs, tag = 'smem constant byte address 0x4 - core index']
  #allocation1 [shape = 'u32[144,128]{1,0:T(1,128)}', space=vmem, size = 0x12000, scoped, tag = 'internal scratch']
  %s0 = inlined_call_operand.vmem [shape: bf16[16,576], index: 0, kind: input, shape index: {}]
  %s1 = inlined_call_operand.vmem [shape: bf16[576,128], index: 1, kind: input, shape index: {}]
  %s2 = inlined_call_operand.vmem [shape: f32[1,128], index: 2, kind: input, shape index: {}]
  %s3 = inlined_call_operand.vmem [shape: bf16[16,128], index: 3, kind: output, shape index: {}]
  %s4 = sld [smem:[#allocation0]]
  $region22: #{dqn_forward.6} parent=0
    _
  %s6 = ssub.s32 1, %s4
  %s7 = scalar_select 0, %s6, %s4
  // Predicated region
  $region2: #{dqn_forward.6} parent=0 // pred_check
    _
  $region3: #{dqn_forward.6} parent=0 // pred_check_branch
    %9 = sbr.rel (0) target = $region5
  $region4: #{dqn_forward.6} parent=0 // pred_region
    _
  $region5: #{dqn_forward.6} parent=0 // pred_fallthru
    _
  // Predicated region
  $region6: #{dqn_forward.6} parent=0 // pred_check
    _
  $region7: #{dqn_forward.6} parent=0 // pred_check_branch
    %11 = sbr.rel (0) target = $region9
  $region8: #{dqn_forward.6} parent=0 // pred_region
    _
  $region9: #{dqn_forward.6} parent=0 // pred_fallthru
    _
  // Predicated region
  $region10: #{dqn_forward.6} parent=0 // pred_check
    _
  $region11: #{dqn_forward.6} parent=0 // pred_check_branch
    %13 = sbr.rel (0) target = $region13
  $region12: #{dqn_forward.6} parent=0 // pred_region
    _
  $region13: #{dqn_forward.6} parent=0 // pred_fallthru
    _
  %v15 = vld [vmem:[%s0] sm:$0xff]
  %v16 = vld [vmem:[%s0 + $0x8] sm:$0xff]
  %v17 = vld [vmem:[%s0 + $0x10] sm:$0xf]
  %v18 = vld [vmem:[%s0 + $0x14] sm:$0xff]
  %v19 = vld [vmem:[%s0 + $0x1c] sm:$0xff]
  %v20 = vld [vmem:[%s0 + $0x24] sm:$0xf]
  %v21 = vld [vmem:[%s1] sm:$0xf]
  %v22 = vld [vmem:[%s1 + $0x4] sm:$0xf]
  %v23 = vld [vmem:[%s1 + $0x8] sm:$0xf]
  %v24 = vld [vmem:[%s1 + $0xc] sm:$0xf]
  %v25 = vld [vmem:[%s1 + $0x10] sm:$0xf]
  %v26 = vld [vmem:[%s1 + $0x14] sm:$0xf]
  %v27 = vld [vmem:[%s1 + $0x18] sm:$0xf]
  %v28 = vld [vmem:[%s1 + $0x1c] sm:$0xf]
  %v29 = vld [vmem:[%s1 + $0x20] sm:$0xf]
  %v30 = vld [vmem:[%s1 + $0x24] sm:$0xf]
  %v31 = vld [vmem:[%s1 + $0x28] sm:$0xf]
  %v32 = vld [vmem:[%s1 + $0x2c] sm:$0xf]
  %v33 = vld [vmem:[%s1 + $0x30] sm:$0xf]
  %v34 = vld [vmem:[%s1 + $0x34] sm:$0xf]
  %v35 = vld [vmem:[%s1 + $0x38] sm:$0xf]
  %v36 = vld [vmem:[%s1 + $0x3c] sm:$0xf]
  %v37 = vld [vmem:[%s1 + $0x40] sm:$0xf]
  %v38 = vld [vmem:[%s1 + $0x44] sm:$0xf]
  %v39 = vld [vmem:[%s1 + $0x48] sm:$0xf]
  %v40 = vld [vmem:[%s1 + $0x4c] sm:$0xf]
  %v41 = vld [vmem:[%s1 + $0x50] sm:$0xf]
  %v42 = vld [vmem:[%s1 + $0x54] sm:$0xf]
  %v43 = vld [vmem:[%s1 + $0x58] sm:$0xf]
  %v44 = vld [vmem:[%s1 + $0x5c] sm:$0xf]
  %v45 = vld [vmem:[%s1 + $0x60] sm:$0xf]
  %v46 = vld [vmem:[%s1 + $0x64] sm:$0xf]
  %v47 = vld [vmem:[%s1 + $0x68] sm:$0xf]
  %v48 = vld [vmem:[%s1 + $0x6c] sm:$0xf]
  %v49 = vld [vmem:[%s1 + $0x70] sm:$0xf]
  %v50 = vld [vmem:[%s1 + $0x74] sm:$0xf]
  %v51 = vld [vmem:[%s1 + $0x78] sm:$0xf]
  %v52 = vld [vmem:[%s1 + $0x7c] sm:$0xf]
  %v53 = vld [vmem:[%s1 + $0x80] sm:$0xf]
  %v54 = vld [vmem:[%s1 + $0x84] sm:$0xf]
  %v55 = vld [vmem:[%s1 + $0x88] sm:$0xf]
  %v56 = vld [vmem:[%s1 + $0x8c] sm:$0xf]
  %v57 = vld [vmem:[%s1 + $0x90] sm:$0xf]
  %v58 = vld [vmem:[%s1 + $0x94] sm:$0xf]
  %v59 = vld [vmem:[%s1 + $0x98] sm:$0xf]
  %v60 = vld [vmem:[%s1 + $0x9c] sm:$0xf]
  %v61 = vld [vmem:[%s1 + $0xa0] sm:$0xf]
  %v62 = vld [vmem:[%s1 + $0xa4] sm:$0xf]
  %v63 = vld [vmem:[%s1 + $0xa8] sm:$0xf]
  %v64 = vld [vmem:[%s1 + $0xac] sm:$0xf]
  %v65 = vld [vmem:[%s1 + $0xb0] sm:$0xf]
  %v66 = vld [vmem:[%s1 + $0xb4] sm:$0xf]
  %v67 = vld [vmem:[%s1 + $0xb8] sm:$0xf]
  %v68 = vld [vmem:[%s1 + $0xbc] sm:$0xf]
  %v69 = vld [vmem:[%s1 + $0xc0] sm:$0xf]
  %v70 = vld [vmem:[%s1 + $0xc4] sm:$0xf]
  %v71 = vld [vmem:[%s1 + $0xc8] sm:$0xf]
  %v72 = vld [vmem:[%s1 + $0xcc] sm:$0xf]
  %v73 = vld [vmem:[%s1 + $0xd0] sm:$0xf]
  %v74 = vld [vmem:[%s1 + $0xd4] sm:$0xf]
  %v75 = vld [vmem:[%s1 + $0xd8] sm:$0xf]
  %v76 = vld [vmem:[%s1 + $0xdc] sm:$0xf]
  %v77 = vld [vmem:[%s1 + $0xe0] sm:$0xf]
  %v78 = vld [vmem:[%s1 + $0xe4] sm:$0xf]
  %v79 = vld [vmem:[%s1 + $0xe8] sm:$0xf]
  %v80 = vld [vmem:[%s1 + $0xec] sm:$0xf]
  %v81 = vld [vmem:[%s1 + $0xf0] sm:$0xf]
  %v82 = vld [vmem:[%s1 + $0xf4] sm:$0xf]
  %v83 = vld [vmem:[%s1 + $0xf8] sm:$0xf]
  %v84 = vld [vmem:[%s1 + $0xfc] sm:$0xf]
  %v85 = vld [vmem:[%s1 + $0x100] sm:$0xf]
  %v86 = vld [vmem:[%s1 + $0x104] sm:$0xf]
  %v87 = vld [vmem:[%s1 + $0x108] sm:$0xf]
  %v88 = vld [vmem:[%s1 + $0x10c] sm:$0xf]
  %v89 = vld [vmem:[%s1 + $0x110] sm:$0xf]
  %v90 = vld [vmem:[%s1 + $0x114] sm:$0xf]
  %v91 = vld [vmem:[%s1 + $0x118] sm:$0xf]
  %v92 = vld [vmem:[%s1 + $0x11c] sm:$0xf]
  %v93 = vld [vmem:[%s2] sm:$0x1]
  %v95 = vlaneseq
  %v96 = vshrl.u32 %v95, 7
  %v97 = vsub.s32 0, %v96
  %v98 = vrot.slane %v93, %v97
  %v106 = vunpack.c.l.b16 %v15
  %v107 = vunpack.c.h.b16 %v15
  %v108 = vunpack.c.l.b16 %v16
  %v109 = vunpack.c.h.b16 %v16
  %v110 = vunpack.c.l.b16 %v17
  %v111 = vunpack.c.l.b16 %v18
  %v112 = vunpack.c.h.b16 %v18
  %v113 = vunpack.c.l.b16 %v19
  %v114 = vunpack.c.h.b16 %v19
  %v115 = vunpack.c.l.b16 %v20
  %v116 = vpack.c.b16 %v111, %v106
  %v117 = vpack.c.b16 %v112, %v107
  %v118 = vpack.c.b16 %v113, %v108
  %v119 = vpack.c.b16 %v114, %v109
  %v120 = vpack.c.b16 %v115, %v110
  %v197 = vunpack.c.l.b16 %v21
  %v198 = vunpack.c.l.b16 %v22
  %v199 = vunpack.c.l.b16 %v23
  %v200 = vunpack.c.l.b16 %v24
  %v201 = vunpack.c.l.b16 %v25
  %v202 = vunpack.c.l.b16 %v26
  %v203 = vunpack.c.l.b16 %v27
  %v204 = vunpack.c.l.b16 %v28
  %v205 = vunpack.c.l.b16 %v29
  %v206 = vunpack.c.l.b16 %v30
  %v207 = vunpack.c.l.b16 %v31
  %v208 = vunpack.c.l.b16 %v32
  %v209 = vunpack.c.l.b16 %v33
  %v210 = vunpack.c.l.b16 %v34
  %v211 = vunpack.c.l.b16 %v35
  %v212 = vunpack.c.l.b16 %v36
  %v213 = vunpack.c.l.b16 %v37
  %v214 = vunpack.c.l.b16 %v38
  %v215 = vunpack.c.l.b16 %v39
  %v216 = vunpack.c.l.b16 %v40
  %v217 = vunpack.c.l.b16 %v41
  %v218 = vunpack.c.l.b16 %v42
  %v219 = vunpack.c.l.b16 %v43
  %v220 = vunpack.c.l.b16 %v44
  %v221 = vunpack.c.l.b16 %v45
  %v222 = vunpack.c.l.b16 %v46
  %v223 = vunpack.c.l.b16 %v47
  %v224 = vunpack.c.l.b16 %v48
  %v225 = vunpack.c.l.b16 %v49
  %v226 = vunpack.c.l.b16 %v50
  %v227 = vunpack.c.l.b16 %v51
  %v228 = vunpack.c.l.b16 %v52
  %v229 = vunpack.c.l.b16 %v53
  %v230 = vunpack.c.l.b16 %v54
  %v231 = vunpack.c.l.b16 %v55
  %v232 = vunpack.c.l.b16 %v56
  %v233 = vunpack.c.l.b16 %v57
  %v234 = vunpack.c.l.b16 %v58
  %v235 = vunpack.c.l.b16 %v59
  %v236 = vunpack.c.l.b16 %v60
  %v237 = vunpack.c.l.b16 %v61
  %v238 = vunpack.c.l.b16 %v62
  %v239 = vunpack.c.l.b16 %v63
  %v240 = vunpack.c.l.b16 %v64
  %v241 = vunpack.c.l.b16 %v65
  %v242 = vunpack.c.l.b16 %v66
  %v243 = vunpack.c.l.b16 %v67
  %v244 = vunpack.c.l.b16 %v68
  %v245 = vunpack.c.l.b16 %v69
  %v246 = vunpack.c.l.b16 %v70
  %v247 = vunpack.c.l.b16 %v71
  %v248 = vunpack.c.l.b16 %v72
  %v249 = vunpack.c.l.b16 %v73
  %v250 = vunpack.c.l.b16 %v74
  %v251 = vunpack.c.l.b16 %v75
  %v252 = vunpack.c.l.b16 %v76
  %v253 = vunpack.c.l.b16 %v77
  %v254 = vunpack.c.l.b16 %v78
  %v255 = vunpack.c.l.b16 %v79
  %v256 = vunpack.c.l.b16 %v80
  %v257 = vunpack.c.l.b16 %v81
  %v258 = vunpack.c.l.b16 %v82
  %v259 = vunpack.c.l.b16 %v83
  %v260 = vunpack.c.l.b16 %v84
  %v261 = vunpack.c.l.b16 %v85
  %v262 = vunpack.c.l.b16 %v86
  %v263 = vunpack.c.l.b16 %v87
  %v264 = vunpack.c.l.b16 %v88
  %v265 = vunpack.c.l.b16 %v89
  %v266 = vunpack.c.l.b16 %v90
  %v267 = vunpack.c.l.b16 %v91
  %v268 = vunpack.c.l.b16 %v92
  %v269 = vpack.c.b16 %v198, %v197
  %v270 = vpack.c.b16 %v200, %v199
  %v271 = vpack.c.b16 %v202, %v201
  %v272 = vpack.c.b16 %v204, %v203
  %v273 = vpack.c.b16 %v206, %v205
  %v274 = vpack.c.b16 %v208, %v207
  %v275 = vpack.c.b16 %v210, %v209
  %v276 = vpack.c.b16 %v212, %v211
  %v277 = vpack.c.b16 %v214, %v213
  %v278 = vpack.c.b16 %v216, %v215
  %v279 = vpack.c.b16 %v218, %v217
  %v280 = vpack.c.b16 %v220, %v219
  %v281 = vpack.c.b16 %v222, %v221
  %v282 = vpack.c.b16 %v224, %v223
  %v283 = vpack.c.b16 %v226, %v225
  %v284 = vpack.c.b16 %v228, %v227
  %v285 = vpack.c.b16 %v230, %v229
  %v286 = vpack.c.b16 %v232, %v231
  %v287 = vpack.c.b16 %v234, %v233
  %v288 = vpack.c.b16 %v236, %v235
  %v289 = vpack.c.b16 %v238, %v237
  %v290 = vpack.c.b16 %v240, %v239
  %v291 = vpack.c.b16 %v242, %v241
  %v292 = vpack.c.b16 %v244, %v243
  %v293 = vpack.c.b16 %v246, %v245
  %v294 = vpack.c.b16 %v248, %v247
  %v295 = vpack.c.b16 %v250, %v249
  %v296 = vpack.c.b16 %v252, %v251
  %v297 = vpack.c.b16 %v254, %v253
  %v298 = vpack.c.b16 %v256, %v255
  %v299 = vpack.c.b16 %v258, %v257
  %v300 = vpack.c.b16 %v260, %v259
  %v301 = vpack.c.b16 %v262, %v261
  %v302 = vpack.c.b16 %v264, %v263
  %v303 = vpack.c.b16 %v266, %v265
  %v304 = vpack.c.b16 %v268, %v267
  %vm341 = vcmask 523264
  %v343 = vsel %vm341, %v120, 0
  %345 = vmatprep.subr.bf16.mxu0 0
  %346 = vmatpush1.bf16.msra.mxu0 %v269
  %347 = vmatprep.subr.bf16.mxu0 0
  %348 = vmatpush1.bf16.msra.mxu0 %v270
  %349 = vmatprep.subr.bf16.mxu0 0
  %350 = vmatpush1.bf16.msra.mxu0 %v271
  %351 = vmatprep.subr.bf16.mxu0 0
  %352 = vmatpush1.bf16.msra.mxu0 %v272
  %353 = vmatprep.subr.bf16.mxu0 0
  %354 = vmatpush1.bf16.msra.mxu0 %v273
  %355 = vmatprep.subr.bf16.mxu0 0
  %356 = vmatpush1.bf16.msra.mxu0 %v274
  %357 = vmatprep.subr.bf16.mxu0 0
  %358 = vmatpush1.bf16.msra.mxu0 %v275
  %359 = vmatprep.subr.bf16.mxu0 0
  %360 = vmatpush1.bf16.msra.mxu0 %v276
  %361 = vmatprep.subr.bf16.mxu0 0
  %362 = vmatpush1.bf16.msra.mxu0 %v277
  %363 = vmatprep.subr.bf16.mxu0 0
  %364 = vmatpush1.bf16.msra.mxu0 %v278
  %365 = vmatprep.subr.bf16.mxu0 0
  %366 = vmatpush1.bf16.msra.mxu0 %v279
  %367 = vmatprep.subr.bf16.mxu0 0
  %368 = vmatpush1.bf16.msra.mxu0 %v280
  %369 = vmatprep.subr.bf16.mxu0 0
  %370 = vmatpush1.bf16.msra.mxu0 %v281
  %371 = vmatprep.subr.bf16.mxu0 0
  %372 = vmatpush1.bf16.msra.mxu0 %v282
  %373 = vmatprep.subr.bf16.mxu0 0
  %374 = vmatpush1.bf16.msra.mxu0 %v283
  %375 = vmatprep.subr.bf16.mxu0 0
  %376 = vmatpush1.bf16.msra.mxu0 %v284
  %377 = vmatprep.mubr.bf16.mxu0 %v117
  %378 = vmatmul.mubr.bf16.gmra.mrb[0].mxu0 %v116
  %v379 = vpop.f32.mrb[0].mxu0
  %v380 = vadd.f32 %v98, %v379
  %v381 = vpop.f32.mrb[0].mxu0
  %v382 = vpop.f32.mrb[0].mxu0
  %v383 = vadd.f32 %v98, %v382
  %v384 = vpop.f32.mrb[0].mxu0
  %385 = vdwg.mxu0
  %386 = vmatprep.subr.bf16.mxu0 0
  %387 = vmatpush1.bf16.msra.mxu0 %v285
  %388 = vmatprep.subr.bf16.mxu0 0
  %389 = vmatpush1.bf16.msra.mxu0 %v286
  %390 = vmatprep.subr.bf16.mxu0 0
  %391 = vmatpush1.bf16.msra.mxu0 %v287
  %392 = vmatprep.subr.bf16.mxu0 0
  %393 = vmatpush1.bf16.msra.mxu0 %v288
  %394 = vmatprep.subr.bf16.mxu0 0
  %395 = vmatpush1.bf16.msra.mxu0 %v289
  %396 = vmatprep.subr.bf16.mxu0 0
  %397 = vmatpush1.bf16.msra.mxu0 %v290
  %398 = vmatprep.subr.bf16.mxu0 0
  %399 = vmatpush1.bf16.msra.mxu0 %v291
  %400 = vmatprep.subr.bf16.mxu0 0
  %401 = vmatpush1.bf16.msra.mxu0 %v292
  %402 = vmatprep.subr.bf16.mxu0 0
  %403 = vmatpush1.bf16.msra.mxu0 %v293
  %404 = vmatprep.subr.bf16.mxu0 0
  %405 = vmatpush1.bf16.msra.mxu0 %v294
  %406 = vmatprep.subr.bf16.mxu0 0
  %407 = vmatpush1.bf16.msra.mxu0 %v295
  %408 = vmatprep.subr.bf16.mxu0 0
  %409 = vmatpush1.bf16.msra.mxu0 %v296
  %410 = vmatprep.subr.bf16.mxu0 0
  %411 = vmatpush1.bf16.msra.mxu0 %v297
  %412 = vmatprep.subr.bf16.mxu0 0
  %413 = vmatpush1.bf16.msra.mxu0 %v298
  %414 = vmatprep.subr.bf16.mxu0 0
  %415 = vmatpush1.bf16.msra.mxu0 %v299
  %416 = vmatprep.subr.bf16.mxu0 0
  %417 = vmatpush1.bf16.msra.mxu0 %v300
  %418 = vmatprep.mubr.bf16.mxu0 %v119
  %419 = vmatmul.mubr.bf16.gmra.mrb[0].mxu0 %v118
  %v420 = vpop.f32.mrb[0].mxu0
  %v421 = vadd.f32 %v380, %v420
  %v422 = vpop.f32.mrb[0].mxu0
  %v423 = vpop.f32.mrb[0].mxu0
  %v424 = vadd.f32 %v383, %v423
  %v425 = vpop.f32.mrb[0].mxu0
  %426 = vdwg.mxu0
  %427 = vmatprep.subr.bf16.mxu0 0
  %428 = vmatpush1.bf16.msra.mxu0 %v301
  %429 = vmatprep.subr.bf16.mxu0 0
  %430 = vmatpush1.bf16.msra.mxu0 %v302
  %431 = vmatprep.subr.bf16.mxu0 0
  %432 = vmatpush1.bf16.msra.mxu0 %v303
  %433 = vmatprep.subr.bf16.mxu0 0
  %434 = vmatpush1.bf16.msra.mxu0 %v304
  %435 = vmatprep.subr.bf16.mxu0 0
  %436 = vmatpush1.bf16.msra.mxu0 0
  %437 = vmatprep.subr.bf16.mxu0 0
  %438 = vmatpush1.bf16.msra.mxu0 0
  %439 = vmatprep.subr.bf16.mxu0 0
  %440 = vmatpush1.bf16.msra.mxu0 0
  %441 = vmatprep.subr.bf16.mxu0 0
  %442 = vmatpush1.bf16.msra.mxu0 0
  %443 = vmatprep.subr.bf16.mxu0 0
  %444 = vmatpush1.bf16.msra.mxu0 0
  %445 = vmatprep.subr.bf16.mxu0 0
  %446 = vmatpush1.bf16.msra.mxu0 0
  %447 = vmatprep.subr.bf16.mxu0 0
  %448 = vmatpush1.bf16.msra.mxu0 0
  %449 = vmatprep.subr.bf16.mxu0 0
  %450 = vmatpush1.bf16.msra.mxu0 0
  %451 = vmatprep.subr.bf16.mxu0 0
  %452 = vmatpush1.bf16.msra.mxu0 0
  %453 = vmatprep.subr.bf16.mxu0 0
  %454 = vmatpush1.bf16.msra.mxu0 0
  %455 = vmatprep.subr.bf16.mxu0 0
  %456 = vmatpush1.bf16.msra.mxu0 0
  %457 = vmatprep.subr.bf16.mxu0 0
  %458 = vmatpush1.bf16.msra.mxu0 0
  %459 = vmatprep.mubr.bf16.mxu0 0
  %460 = vmatmul.mubr.bf16.gmra.mrb[0].mxu0 %v343
  %v461 = vpop.f32.mrb[0].mxu0
  %v462 = vadd.f32 %v421, %v461
  %v463 = vpop.f32.mrb[0].mxu0
  %v464 = vpop.f32.mrb[0].mxu0
  %v465 = vadd.f32 %v424, %v464
  %v466 = vpop.f32.mrb[0].mxu0
  %467 = vdwg.mxu0
  %v468 = vmax.f32 %v462, 0.0
  %v469 = vmax.f32 %v465, 0.0
  %v470 = vpack.c.bf16 %v469, %v468
  %v472 = vunpack.c.l.b16 %v470
  %v473 = vunpack.c.h.b16 %v470
  %v474 = vpack.c.b16 %v472, %v472
  %v475 = vpack.c.b16 %v473, %v473
  %478 = vst [vmem:[%s3] sm:$0xf] %v474
  %479 = vst [vmem:[%s3 + $0x4] sm:$0xf] %v475
  // Predicated region
  $region14: #{dqn_forward.6} parent=0 // pred_check
    _
  $region15: #{dqn_forward.6} parent=0 // pred_check_branch
    %481 = sbr.rel (0) target = $region17
  $region16: #{dqn_forward.6} parent=0 // pred_region
    _
  $region17: #{dqn_forward.6} parent=0 // pred_fallthru
    _
  // Predicated region
  $region18: #{dqn_forward.6} parent=0 // pred_check
    _
  $region19: #{dqn_forward.6} parent=0 // pred_check_branch
    %483 = sbr.rel (0) target = $region21
  $region20: #{dqn_forward.6} parent=0 // pred_region
    _
  $region21: #{dqn_forward.6} parent=0 // pred_fallthru
    _

</llo_original>
